<compile_context>
chip_gen: v5e
topology: v5e:2x2
jax: 0.10.0
libtpu: 0.0.40
codegen_flags: <defaults>
</compile_context>

<pallas_src>
import functools
import math

import jax
import jax.numpy as jnp
from jax.experimental import pallas as pl
from jax.experimental.pallas import tpu as pltpu


# ----------------------------------------------------------------------------
# Fused Pallas kernel: whole Bottle2neck block for one lane-block of images
# ----------------------------------------------------------------------------

def _bottle2neck_kernel(x_ref, w1_ref, b1_ref, wmask_ref, bdw_ref, w3_ref, b3_ref,
                        o_ref, *, width, scale, nums, W_img, L):
    # x_ref:    (Cin, L)              input, channels on sublanes, N*H*W on lanes
    # w1_ref:   (Cmid, Cin)           conv1 1x1 weights (BN folded)
    # b1_ref:   (Cmid, 1)             conv1 folded BN bias
    # wmask_ref:(nums*9, width, L)    depthwise tap weights x edge masks (BN folded)
    # bdw_ref:  (nums, width, L)      depthwise folded BN bias, lane-broadcast
    # w3_ref:   (Cout, Cmid)          conv3 1x1 weights (BN folded)
    # b3_ref:   (Cout, 1)             conv3 folded BN bias
    # o_ref:    (Cout, L)             output

    # --- conv1 (1x1, BN folded) + ReLU -> (Cmid, L), lane-dense MXU matmul ----
    out1 = jnp.dot(w1_ref[...], x_ref[...], preferred_element_type=jnp.float32)
    out1 = jnp.maximum(out1 + b1_ref[...], 0.0)

    # --- hierarchical depthwise 3x3 convs (BN + edge masks folded) + ReLU -----
    pieces = []
    sp = None
    for i in range(nums):
        spx_i = out1[i * width:(i + 1) * width, :]          # (width, L)
        sp_in = spx_i if i == 0 else sp + spx_i             # stype == 'normal'
        # Initialize with center tap + folded BN bias (no zeros, no extra adds).
        acc = bdw_ref[i] + sp_in * wmask_ref[i * 9 + 4]
        for dh in (-1, 0, 1):
            for dw in (-1, 0, 1):
                if dh == 0 and dw == 0:
                    continue
                t = (dh + 1) * 3 + (dw + 1)
                d = dh * W_img + dw                          # flat-index offset
                # shifted[:, p] == sp_in[:, (p + d) mod L]; out-of-row /
                # out-of-image taps are zeroed by the mask folded into wmask.
                shifted = pltpu.roll(sp_in, (-d) % L, axis=1)
                acc = acc + shifted * wmask_ref[i * 9 + t]
        sp = jnp.maximum(acc, 0.0)
        pieces.append(sp)
    if scale != 1:                                          # stype == 'normal'
        pieces.append(out1[nums * width:, :])
    cat = jnp.concatenate(pieces, axis=0)                   # (Cmid, L)

    # --- conv3 (1x1, BN folded) + identity residual + ReLU --------------------
    out = jnp.dot(w3_ref[...], cat, preferred_element_type=jnp.float32)
    # Re-read x from the VMEM ref here instead of holding it live all along.
    out = out + b3_ref[...] + x_ref[...]                    # Cin == Cout, no downsample
    o_ref[...] = jnp.maximum(out, 0.0)


# ----------------------------------------------------------------------------
# Host-side param preparation (BN folding + mask folding + kernel layouts)
# ----------------------------------------------------------------------------

def prepare_kernel_params(p, *, width, scale, H, W, nb):
    """Fold BN into weights/biases and fold 3x3 edge masks into the tap weights.

    nb = images per grid step; the depthwise tensors are built at lane width
    L = nb * H * W (per-image mask pattern tiled nb times along lanes).
    """
    nums = 1 if scale == 1 else scale - 1
    HW = H * W
    L = nb * HW

    # conv1 (BN folded)
    w1f = p["w1"] * p["s1"][:, None]                        # (Cmid, Cin)
    b1 = p["b1"][:, None]                                   # (Cmid, 1)

    # Per-image edge masks for the 9 taps, positions taken modulo HW so that
    # rolls over the packed (batch-in-lanes) axis never leak across images.
    pos = jnp.arange(HW, dtype=jnp.int32)
    row = pos // W
    col = pos % W
    masks = []
    for dh in (-1, 0, 1):
        for dw in (-1, 0, 1):
            m = jnp.ones((HW,), jnp.float32)
            if dh == -1:
                m = m * (row >= 1).astype(jnp.float32)
            if dh == 1:
                m = m * (row <= H - 2).astype(jnp.float32)
            if dw == -1:
                m = m * (col >= 1).astype(jnp.float32)
            if dw == 1:
                m = m * (col <= W - 2).astype(jnp.float32)
            masks.append(m)
    mask9 = jnp.tile(jnp.stack(masks, axis=0), (1, nb))     # (9, L)

    # depthwise weights: BN scale folded, then edge mask folded per lane.
    kdw = jnp.stack([p["kdw"][i] * p["sdw"][i][None, :] for i in range(nums)])
    # (nums, 9, width) * (9, L) -> (nums*9, width, L)
    wmask = (kdw[:, :, :, None] * mask9[None, :, None, :]).reshape(nums * 9, width, L)

    # depthwise folded BN bias, pre-broadcast over lanes (used as acc init).
    bdw = jnp.stack([p["bdw"][i] for i in range(nums)])     # (nums, width)
    bdw_full = jnp.tile(bdw[:, :, None], (1, 1, L))         # (nums, width, L)

    # conv3 (BN folded)
    w3f = p["w3"] * p["s3"][:, None]                        # (Cout, Cmid)
    b3 = p["b3"][:, None]                                   # (Cout, 1)

    return dict(w1=w1f, b1=b1, wmask=wmask, bdw=bdw_full, w3=w3f, b3=b3)


def bottle2neck_forward(x_nchw, params, *, width, scale, images_per_step=None):
    nums = 1 if scale == 1 else scale - 1
    N, Cin, H, W = x_nchw.shape
    HW = H * W

    # One big lane-dense step by default (best on single-TC v5e/v6e; this kernel
    # is overhead-bound, not compute/DMA/VMEM bound).  On v7x set
    # images_per_step = max(1, N // 2) to get >=2 "parallel" steps for megacore.
    nb = N if images_per_step is None else images_per_step
    assert N % nb == 0, "batch must be divisible by images_per_step"
    num_steps = N // nb
    L = nb * HW

    kp = prepare_kernel_params(params, width=width, scale=scale, H=H, W=W, nb=nb)
    Cmid = kp["w1"].shape[0]
    Cout = kp["w3"].shape[0]
    assert Cin == Cout, "identity residual requires inplanes == planes * expansion"

    # NCHW -> (Cin, N*HW): channels on sublanes, batch*spatial on the lane axis.
    x_flat = x_nchw.astype(jnp.float32).transpose(1, 0, 2, 3).reshape(Cin, N * HW)

    kernel = functools.partial(_bottle2neck_kernel, width=width, scale=scale,
                               nums=nums, W_img=W, L=L)

    out_flat = pl.pallas_call(
        kernel,
        out_shape=jax.ShapeDtypeStruct((Cout, N * HW), jnp.float32),
        grid=(num_steps,),
        in_specs=[
            pl.BlockSpec((Cin, L), lambda g: (0, g)),
            pl.BlockSpec((Cmid, Cin), lambda g: (0, 0)),
            pl.BlockSpec((Cmid, 1), lambda g: (0, 0)),
            pl.BlockSpec((nums * 9, width, L), lambda g: (0, 0, 0)),
            pl.BlockSpec((nums, width, L), lambda g: (0, 0, 0)),
            pl.BlockSpec((Cout, Cmid), lambda g: (0, 0)),
            pl.BlockSpec((Cout, 1), lambda g: (0, 0)),
        ],
        out_specs=pl.BlockSpec((Cout, L), lambda g: (0, g)),
        compiler_params=pltpu.CompilerParams(dimension_semantics=("parallel",)),
    )(x_flat, kp["w1"], kp["b1"], kp["wmask"], kp["bdw"], kp["w3"], kp["b3"])

    return out_flat.reshape(Cout, N, H, W).transpose(1, 0, 2, 3)   # back to NCHW


# ----------------------------------------------------------------------------
# Plain-JAX reference (unfolded BN), for correctness checking
# ----------------------------------------------------------------------------

def bottle2neck_reference(x_nchw, p, *, width, scale):
    nums = 1 if scale == 1 else scale - 1
    x = x_nchw.astype(jnp.float32)
    N, Cin, H, W = x.shape

    def bn(v, s, b):
        return v * s[None, :, None, None] + b[None, :, None, None]

    out1 = jnp.maximum(bn(jnp.einsum("oc,nchw->nohw", p["w1"], x),
                          p["s1"], p["b1"]), 0.0)
    pieces = []
    sp = None
    for i in range(nums):
        spx_i = out1[:, i * width:(i + 1) * width]
        sp_in = spx_i if i == 0 else sp + spx_i
        sp_pad = jnp.pad(sp_in, ((0, 0), (0, 0), (1, 1), (1, 1)))
        k = p["kdw"][i].reshape(3, 3, width)
        acc = jnp.zeros_like(spx_i)
        for dh in range(3):
            for dw in range(3):
                acc = acc + sp_pad[:, :, dh:dh + H, dw:dw + W] \
                      * k[dh, dw][None, :, None, None]
        sp = jnp.maximum(bn(acc, p["sdw"][i], p["bdw"][i]), 0.0)
        pieces.append(sp)
    if scale != 1:
        pieces.append(out1[:, nums * width:])
    cat = jnp.concatenate(pieces, axis=1)
    out = bn(jnp.einsum("oc,nchw->nohw", p["w3"], cat), p["s3"], p["b3"]) + x
    return jnp.maximum(out, 0.0)


# ----------------------------------------------------------------------------
# Deterministic parameter construction
# ----------------------------------------------------------------------------

def make_params(key, inplanes, planes, baseWidth, scale):
    width = int(math.floor(planes * (baseWidth / 64.0)))
    nums = 1 if scale == 1 else scale - 1
    cmid = width * scale
    cout = planes * 4
    eps = 1e-5
    ks = jax.random.split(key, 8 + 4 * nums)

    def bn_affine(kg, kb, c):
        gamma = 1.0 + 0.1 * jax.random.normal(kg, (c,), jnp.float32)
        beta = 0.1 * jax.random.normal(kb, (c,), jnp.float32)
        mean = 0.1 * jax.random.normal(jax.random.fold_in(kg, 1), (c,), jnp.float32)
        var = jax.random.uniform(jax.random.fold_in(kb, 1), (c,), jnp.float32,
                                 0.5, 1.5)
        s = gamma / jnp.sqrt(var + eps)
        b = beta - mean * s
        return s, b

    p = {}
    p["w1"] = 0.1 * jax.random.normal(ks[0], (cmid, inplanes), jnp.float32)
    p["s1"], p["b1"] = bn_affine(ks[1], ks[2], cmid)

    p["kdw"], p["sdw"], p["bdw"] = [], [], []
    for i in range(nums):
        p["kdw"].append(0.2 * jax.random.normal(ks[3 + 3 * i], (9, width),
                                                jnp.float32))
        s, b = bn_affine(ks[4 + 3 * i], ks[5 + 3 * i], width)
        p["sdw"].append(s)
        p["bdw"].append(b)

    p["w3"] = 0.1 * jax.random.normal(ks[3 + 3 * nums], (cout, cmid), jnp.float32)
    p["s3"], p["b3"] = bn_affine(ks[4 + 3 * nums], ks[5 + 3 * nums], cout)
    return p, width


# ----------------------------------------------------------------------------

if __name__ == "__main__":
    inplanes, planes, baseWidth, scale = 32, 8, 32, 4   # width=4, conv1 32->16, conv3 16->32
    key = jax.random.PRNGKey(0)
    kp_key, kx_key = jax.random.split(key)
    params, width = make_params(kp_key, inplanes, planes, baseWidth, scale)

    # PyTorch-style NCHW input; batch*H*W = 512 lanes in the fused kernel.
    x = jax.random.normal(kx_key, (2, inplanes, 16, 16), jnp.float32)

    fwd = jax.jit(functools.partial(bottle2neck_forward, width=width, scale=scale))
    out = jax.block_until_ready(fwd(x, params))

    ref = jax.block_until_ready(
        bottle2neck_reference(x, params, width=width, scale=scale))

    assert out.shape == (2, planes * 4, 16, 16), out.shape
    max_err = float(jnp.max(jnp.abs(out - ref)))
    assert jnp.allclose(out, ref, atol=2e-3, rtol=2e-3), max_err
    print("KERNEL_OK")
</pallas_src>

<mosaic_0001>
module attributes {stable_mosaic.version = 11 : i64} {
  func.func @_bottle2neck_kernel(%arg0: i32, %arg1: memref<32x512xf32, #tpu.memory_space<vmem>>, %arg2: memref<16x32xf32, #tpu.memory_space<vmem>>, %arg3: memref<16x1xf32, #tpu.memory_space<vmem>>, %arg4: memref<27x4x512xf32, #tpu.memory_space<vmem>>, %arg5: memref<3x4x512xf32, #tpu.memory_space<vmem>>, %arg6: memref<32x16xf32, #tpu.memory_space<vmem>>, %arg7: memref<32x1xf32, #tpu.memory_space<vmem>>, %arg8: memref<32x512xf32, #tpu.memory_space<vmem>>) attributes {dimension_semantics = [#tpu.dimension_semantics<parallel>], iteration_bounds = array<i64: 1>, scalar_prefetch = 0 : i64, scratch_operands = 0 : i64, tpu.core_type = #tpu.core_type<tc>, window_params = [{transform_indices = @transform_0, window_bounds = array<i64: 32, 512>}, {pipeline_mode = #tpu.pipeline_mode<synchronous>, transform_indices = @transform_1, window_bounds = array<i64: 16, 32>}, {pipeline_mode = #tpu.pipeline_mode<synchronous>, transform_indices = @transform_2, window_bounds = array<i64: 16, 1>}, {pipeline_mode = #tpu.pipeline_mode<synchronous>, transform_indices = @transform_3, window_bounds = array<i64: 27, 4, 512>}, {pipeline_mode = #tpu.pipeline_mode<synchronous>, transform_indices = @transform_4, window_bounds = array<i64: 3, 4, 512>}, {pipeline_mode = #tpu.pipeline_mode<synchronous>, transform_indices = @transform_5, window_bounds = array<i64: 32, 16>}, {pipeline_mode = #tpu.pipeline_mode<synchronous>, transform_indices = @transform_6, window_bounds = array<i64: 32, 1>}, {transform_indices = @transform_7, window_bounds = array<i64: 32, 512>}]} {
    %c0 = arith.constant 0 : index
    %c0_0 = arith.constant 0 : index
    %0 = vector.load %arg2[%c0, %c0_0] : memref<16x32xf32, #tpu.memory_space<vmem>>, vector<16x32xf32>
    %c0_1 = arith.constant 0 : index
    %c0_2 = arith.constant 0 : index
    %1 = vector.load %arg1[%c0_1, %c0_2] : memref<32x512xf32, #tpu.memory_space<vmem>>, vector<32x512xf32>
    %cst = arith.constant dense<0.000000e+00> : vector<16x512xf32>
    %2 = tpu.matmul %0, %1, %cst {dimension_numbers = #tpu.dot_dimension_numbers<[1], [0], [0], [1], [0, 0, 1, 1], [], []>} : vector<16x32xf32>, vector<32x512xf32>, vector<16x512xf32> -> vector<16x512xf32>
    %c0_3 = arith.constant 0 : index
    %c0_4 = arith.constant 0 : index
    %3 = vector.load %arg3[%c0_3, %c0_4] : memref<16x1xf32, #tpu.memory_space<vmem>>, vector<16x1xf32>
    %4 = vector.broadcast %3 : vector<16x1xf32> to vector<16x512xf32>
    %5 = arith.addf %2, %4 : vector<16x512xf32>
    %cst_5 = arith.constant 0.000000e+00 : f32
    %6 = vector.broadcast %cst_5 : f32 to vector<16x512xf32>
    %7 = arith.maximumf %5, %6 : vector<16x512xf32>
    %8 = vector.extract_strided_slice %7 {offsets = [0, 0], sizes = [4, 512], strides = [1, 1]} : vector<16x512xf32> to vector<4x512xf32>
    %c0_6 = arith.constant 0 : index
    %c0_7 = arith.constant 0 : index
    %c0_8 = arith.constant 0 : index
    %9 = vector.load %arg5[%c0_6, %c0_7, %c0_8] : memref<3x4x512xf32, #tpu.memory_space<vmem>>, vector<1x4x512xf32>
    %10 = vector.shape_cast %9 : vector<1x4x512xf32> to vector<4x512xf32>
    %c4 = arith.constant 4 : index
    %c0_9 = arith.constant 0 : index
    %c0_10 = arith.constant 0 : index
    %11 = vector.load %arg4[%c4, %c0_9, %c0_10] : memref<27x4x512xf32, #tpu.memory_space<vmem>>, vector<1x4x512xf32>
    %12 = vector.shape_cast %11 : vector<1x4x512xf32> to vector<4x512xf32>
    %13 = arith.mulf %8, %12 : vector<4x512xf32>
    %14 = arith.addf %10, %13 : vector<4x512xf32>
    %c17_i32 = arith.constant 17 : i32
    %15 = tpu.dynamic_rotate %8 by %c17_i32 dim 1 : vector<4x512xf32>, i32 -> vector<4x512xf32>
    %c0_11 = arith.constant 0 : index
    %c0_12 = arith.constant 0 : index
    %c0_13 = arith.constant 0 : index
    %16 = vector.load %arg4[%c0_11, %c0_12, %c0_13] : memref<27x4x512xf32, #tpu.memory_space<vmem>>, vector<1x4x512xf32>
    %17 = vector.shape_cast %16 : vector<1x4x512xf32> to vector<4x512xf32>
    %18 = arith.mulf %15, %17 : vector<4x512xf32>
    %19 = arith.addf %14, %18 : vector<4x512xf32>
    %c16_i32 = arith.constant 16 : i32
    %20 = tpu.dynamic_rotate %8 by %c16_i32 dim 1 : vector<4x512xf32>, i32 -> vector<4x512xf32>
    %c1 = arith.constant 1 : index
    %c0_14 = arith.constant 0 : index
    %c0_15 = arith.constant 0 : index
    %21 = vector.load %arg4[%c1, %c0_14, %c0_15] : memref<27x4x512xf32, #tpu.memory_space<vmem>>, vector<1x4x512xf32>
    %22 = vector.shape_cast %21 : vector<1x4x512xf32> to vector<4x512xf32>
    %23 = arith.mulf %20, %22 : vector<4x512xf32>
    %24 = arith.addf %19, %23 : vector<4x512xf32>
    %c15_i32 = arith.constant 15 : i32
    %25 = tpu.dynamic_rotate %8 by %c15_i32 dim 1 : vector<4x512xf32>, i32 -> vector<4x512xf32>
    %c2 = arith.constant 2 : index
    %c0_16 = arith.constant 0 : index
    %c0_17 = arith.constant 0 : index
    %26 = vector.load %arg4[%c2, %c0_16, %c0_17] : memref<27x4x512xf32, #tpu.memory_space<vmem>>, vector<1x4x512xf32>
    %27 = vector.shape_cast %26 : vector<1x4x512xf32> to vector<4x512xf32>
    %28 = arith.mulf %25, %27 : vector<4x512xf32>
    %29 = arith.addf %24, %28 : vector<4x512xf32>
    %c1_i32 = arith.constant 1 : i32
    %30 = tpu.dynamic_rotate %8 by %c1_i32 dim 1 : vector<4x512xf32>, i32 -> vector<4x512xf32>
    %c3 = arith.constant 3 : index
    %c0_18 = arith.constant 0 : index
    %c0_19 = arith.constant 0 : index
    %31 = vector.load %arg4[%c3, %c0_18, %c0_19] : memref<27x4x512xf32, #tpu.memory_space<vmem>>, vector<1x4x512xf32>
    %32 = vector.shape_cast %31 : vector<1x4x512xf32> to vector<4x512xf32>
    %33 = arith.mulf %30, %32 : vector<4x512xf32>
    %34 = arith.addf %29, %33 : vector<4x512xf32>
    %c511_i32 = arith.constant 511 : i32
    %35 = tpu.dynamic_rotate %8 by %c511_i32 dim 1 : vector<4x512xf32>, i32 -> vector<4x512xf32>
    %c5 = arith.constant 5 : index
    %c0_20 = arith.constant 0 : index
    %c0_21 = arith.constant 0 : index
    %36 = vector.load %arg4[%c5, %c0_20, %c0_21] : memref<27x4x512xf32, #tpu.memory_space<vmem>>, vector<1x4x512xf32>
    %37 = vector.shape_cast %36 : vector<1x4x512xf32> to vector<4x512xf32>
    %38 = arith.mulf %35, %37 : vector<4x512xf32>
    %39 = arith.addf %34, %38 : vector<4x512xf32>
    %c497_i32 = arith.constant 497 : i32
    %40 = tpu.dynamic_rotate %8 by %c497_i32 dim 1 : vector<4x512xf32>, i32 -> vector<4x512xf32>
    %c6 = arith.constant 6 : index
    %c0_22 = arith.constant 0 : index
    %c0_23 = arith.constant 0 : index
    %41 = vector.load %arg4[%c6, %c0_22, %c0_23] : memref<27x4x512xf32, #tpu.memory_space<vmem>>, vector<1x4x512xf32>
    %42 = vector.shape_cast %41 : vector<1x4x512xf32> to vector<4x512xf32>
    %43 = arith.mulf %40, %42 : vector<4x512xf32>
    %44 = arith.addf %39, %43 : vector<4x512xf32>
    %c496_i32 = arith.constant 496 : i32
    %45 = tpu.dynamic_rotate %8 by %c496_i32 dim 1 : vector<4x512xf32>, i32 -> vector<4x512xf32>
    %c7 = arith.constant 7 : index
    %c0_24 = arith.constant 0 : index
    %c0_25 = arith.constant 0 : index
    %46 = vector.load %arg4[%c7, %c0_24, %c0_25] : memref<27x4x512xf32, #tpu.memory_space<vmem>>, vector<1x4x512xf32>
    %47 = vector.shape_cast %46 : vector<1x4x512xf32> to vector<4x512xf32>
    %48 = arith.mulf %45, %47 : vector<4x512xf32>
    %49 = arith.addf %44, %48 : vector<4x512xf32>
    %c495_i32 = arith.constant 495 : i32
    %50 = tpu.dynamic_rotate %8 by %c495_i32 dim 1 : vector<4x512xf32>, i32 -> vector<4x512xf32>
    %c8 = arith.constant 8 : index
    %c0_26 = arith.constant 0 : index
    %c0_27 = arith.constant 0 : index
    %51 = vector.load %arg4[%c8, %c0_26, %c0_27] : memref<27x4x512xf32, #tpu.memory_space<vmem>>, vector<1x4x512xf32>
    %52 = vector.shape_cast %51 : vector<1x4x512xf32> to vector<4x512xf32>
    %53 = arith.mulf %50, %52 : vector<4x512xf32>
    %54 = arith.addf %49, %53 : vector<4x512xf32>
    %cst_28 = arith.constant 0.000000e+00 : f32
    %55 = vector.broadcast %cst_28 : f32 to vector<4x512xf32>
    %56 = arith.maximumf %54, %55 : vector<4x512xf32>
    %57 = vector.extract_strided_slice %7 {offsets = [4, 0], sizes = [4, 512], strides = [1, 1]} : vector<16x512xf32> to vector<4x512xf32>
    %58 = arith.addf %56, %57 : vector<4x512xf32>
    %c1_29 = arith.constant 1 : index
    %c0_30 = arith.constant 0 : index
    %c0_31 = arith.constant 0 : index
    %59 = vector.load %arg5[%c1_29, %c0_30, %c0_31] : memref<3x4x512xf32, #tpu.memory_space<vmem>>, vector<1x4x512xf32>
    %60 = vector.shape_cast %59 : vector<1x4x512xf32> to vector<4x512xf32>
    %c13 = arith.constant 13 : index
    %c0_32 = arith.constant 0 : index
    %c0_33 = arith.constant 0 : index
    %61 = vector.load %arg4[%c13, %c0_32, %c0_33] : memref<27x4x512xf32, #tpu.memory_space<vmem>>, vector<1x4x512xf32>
    %62 = vector.shape_cast %61 : vector<1x4x512xf32> to vector<4x512xf32>
    %63 = arith.mulf %58, %62 : vector<4x512xf32>
    %64 = arith.addf %60, %63 : vector<4x512xf32>
    %c17_i32_34 = arith.constant 17 : i32
    %65 = tpu.dynamic_rotate %58 by %c17_i32_34 dim 1 : vector<4x512xf32>, i32 -> vector<4x512xf32>
    %c9 = arith.constant 9 : index
    %c0_35 = arith.constant 0 : index
    %c0_36 = arith.constant 0 : index
    %66 = vector.load %arg4[%c9, %c0_35, %c0_36] : memref<27x4x512xf32, #tpu.memory_space<vmem>>, vector<1x4x512xf32>
    %67 = vector.shape_cast %66 : vector<1x4x512xf32> to vector<4x512xf32>
    %68 = arith.mulf %65, %67 : vector<4x512xf32>
    %69 = arith.addf %64, %68 : vector<4x512xf32>
    %c16_i32_37 = arith.constant 16 : i32
    %70 = tpu.dynamic_rotate %58 by %c16_i32_37 dim 1 : vector<4x512xf32>, i32 -> vector<4x512xf32>
    %c10 = arith.constant 10 : index
    %c0_38 = arith.constant 0 : index
    %c0_39 = arith.constant 0 : index
    %71 = vector.load %arg4[%c10, %c0_38, %c0_39] : memref<27x4x512xf32, #tpu.memory_space<vmem>>, vector<1x4x512xf32>
    %72 = vector.shape_cast %71 : vector<1x4x512xf32> to vector<4x512xf32>
    %73 = arith.mulf %70, %72 : vector<4x512xf32>
    %74 = arith.addf %69, %73 : vector<4x512xf32>
    %c15_i32_40 = arith.constant 15 : i32
    %75 = tpu.dynamic_rotate %58 by %c15_i32_40 dim 1 : vector<4x512xf32>, i32 -> vector<4x512xf32>
    %c11 = arith.constant 11 : index
    %c0_41 = arith.constant 0 : index
    %c0_42 = arith.constant 0 : index
    %76 = vector.load %arg4[%c11, %c0_41, %c0_42] : memref<27x4x512xf32, #tpu.memory_space<vmem>>, vector<1x4x512xf32>
    %77 = vector.shape_cast %76 : vector<1x4x512xf32> to vector<4x512xf32>
    %78 = arith.mulf %75, %77 : vector<4x512xf32>
    %79 = arith.addf %74, %78 : vector<4x512xf32>
    %c1_i32_43 = arith.constant 1 : i32
    %80 = tpu.dynamic_rotate %58 by %c1_i32_43 dim 1 : vector<4x512xf32>, i32 -> vector<4x512xf32>
    %c12 = arith.constant 12 : index
    %c0_44 = arith.constant 0 : index
    %c0_45 = arith.constant 0 : index
    %81 = vector.load %arg4[%c12, %c0_44, %c0_45] : memref<27x4x512xf32, #tpu.memory_space<vmem>>, vector<1x4x512xf32>
    %82 = vector.shape_cast %81 : vector<1x4x512xf32> to vector<4x512xf32>
    %83 = arith.mulf %80, %82 : vector<4x512xf32>
    %84 = arith.addf %79, %83 : vector<4x512xf32>
    %c511_i32_46 = arith.constant 511 : i32
    %85 = tpu.dynamic_rotate %58 by %c511_i32_46 dim 1 : vector<4x512xf32>, i32 -> vector<4x512xf32>
    %c14 = arith.constant 14 : index
    %c0_47 = arith.constant 0 : index
    %c0_48 = arith.constant 0 : index
    %86 = vector.load %arg4[%c14, %c0_47, %c0_48] : memref<27x4x512xf32, #tpu.memory_space<vmem>>, vector<1x4x512xf32>
    %87 = vector.shape_cast %86 : vector<1x4x512xf32> to vector<4x512xf32>
    %88 = arith.mulf %85, %87 : vector<4x512xf32>
    %89 = arith.addf %84, %88 : vector<4x512xf32>
    %c497_i32_49 = arith.constant 497 : i32
    %90 = tpu.dynamic_rotate %58 by %c497_i32_49 dim 1 : vector<4x512xf32>, i32 -> vector<4x512xf32>
    %c15 = arith.constant 15 : index
    %c0_50 = arith.constant 0 : index
    %c0_51 = arith.constant 0 : index
    %91 = vector.load %arg4[%c15, %c0_50, %c0_51] : memref<27x4x512xf32, #tpu.memory_space<vmem>>, vector<1x4x512xf32>
    %92 = vector.shape_cast %91 : vector<1x4x512xf32> to vector<4x512xf32>
    %93 = arith.mulf %90, %92 : vector<4x512xf32>
    %94 = arith.addf %89, %93 : vector<4x512xf32>
    %c496_i32_52 = arith.constant 496 : i32
    %95 = tpu.dynamic_rotate %58 by %c496_i32_52 dim 1 : vector<4x512xf32>, i32 -> vector<4x512xf32>
    %c16 = arith.constant 16 : index
    %c0_53 = arith.constant 0 : index
    %c0_54 = arith.constant 0 : index
    %96 = vector.load %arg4[%c16, %c0_53, %c0_54] : memref<27x4x512xf32, #tpu.memory_space<vmem>>, vector<1x4x512xf32>
    %97 = vector.shape_cast %96 : vector<1x4x512xf32> to vector<4x512xf32>
    %98 = arith.mulf %95, %97 : vector<4x512xf32>
    %99 = arith.addf %94, %98 : vector<4x512xf32>
    %c495_i32_55 = arith.constant 495 : i32
    %100 = tpu.dynamic_rotate %58 by %c495_i32_55 dim 1 : vector<4x512xf32>, i32 -> vector<4x512xf32>
    %c17 = arith.constant 17 : index
    %c0_56 = arith.constant 0 : index
    %c0_57 = arith.constant 0 : index
    %101 = vector.load %arg4[%c17, %c0_56, %c0_57] : memref<27x4x512xf32, #tpu.memory_space<vmem>>, vector<1x4x512xf32>
    %102 = vector.shape_cast %101 : vector<1x4x512xf32> to vector<4x512xf32>
    %103 = arith.mulf %100, %102 : vector<4x512xf32>
    %104 = arith.addf %99, %103 : vector<4x512xf32>
    %cst_58 = arith.constant 0.000000e+00 : f32
    %105 = vector.broadcast %cst_58 : f32 to vector<4x512xf32>
    %106 = arith.maximumf %104, %105 : vector<4x512xf32>
    %107 = vector.extract_strided_slice %7 {offsets = [8, 0], sizes = [4, 512], strides = [1, 1]} : vector<16x512xf32> to vector<4x512xf32>
    %108 = arith.addf %106, %107 : vector<4x512xf32>
    %c2_59 = arith.constant 2 : index
    %c0_60 = arith.constant 0 : index
    %c0_61 = arith.constant 0 : index
    %109 = vector.load %arg5[%c2_59, %c0_60, %c0_61] : memref<3x4x512xf32, #tpu.memory_space<vmem>>, vector<1x4x512xf32>
    %110 = vector.shape_cast %109 : vector<1x4x512xf32> to vector<4x512xf32>
    %c22 = arith.constant 22 : index
    %c0_62 = arith.constant 0 : index
    %c0_63 = arith.constant 0 : index
    %111 = vector.load %arg4[%c22, %c0_62, %c0_63] : memref<27x4x512xf32, #tpu.memory_space<vmem>>, vector<1x4x512xf32>
    %112 = vector.shape_cast %111 : vector<1x4x512xf32> to vector<4x512xf32>
    %113 = arith.mulf %108, %112 : vector<4x512xf32>
    %114 = arith.addf %110, %113 : vector<4x512xf32>
    %c17_i32_64 = arith.constant 17 : i32
    %115 = tpu.dynamic_rotate %108 by %c17_i32_64 dim 1 : vector<4x512xf32>, i32 -> vector<4x512xf32>
    %c18 = arith.constant 18 : index
    %c0_65 = arith.constant 0 : index
    %c0_66 = arith.constant 0 : index
    %116 = vector.load %arg4[%c18, %c0_65, %c0_66] : memref<27x4x512xf32, #tpu.memory_space<vmem>>, vector<1x4x512xf32>
    %117 = vector.shape_cast %116 : vector<1x4x512xf32> to vector<4x512xf32>
    %118 = arith.mulf %115, %117 : vector<4x512xf32>
    %119 = arith.addf %114, %118 : vector<4x512xf32>
    %c16_i32_67 = arith.constant 16 : i32
    %120 = tpu.dynamic_rotate %108 by %c16_i32_67 dim 1 : vector<4x512xf32>, i32 -> vector<4x512xf32>
    %c19 = arith.constant 19 : index
    %c0_68 = arith.constant 0 : index
    %c0_69 = arith.constant 0 : index
    %121 = vector.load %arg4[%c19, %c0_68, %c0_69] : memref<27x4x512xf32, #tpu.memory_space<vmem>>, vector<1x4x512xf32>
    %122 = vector.shape_cast %121 : vector<1x4x512xf32> to vector<4x512xf32>
    %123 = arith.mulf %120, %122 : vector<4x512xf32>
    %124 = arith.addf %119, %123 : vector<4x512xf32>
    %c15_i32_70 = arith.constant 15 : i32
    %125 = tpu.dynamic_rotate %108 by %c15_i32_70 dim 1 : vector<4x512xf32>, i32 -> vector<4x512xf32>
    %c20 = arith.constant 20 : index
    %c0_71 = arith.constant 0 : index
    %c0_72 = arith.constant 0 : index
    %126 = vector.load %arg4[%c20, %c0_71, %c0_72] : memref<27x4x512xf32, #tpu.memory_space<vmem>>, vector<1x4x512xf32>
    %127 = vector.shape_cast %126 : vector<1x4x512xf32> to vector<4x512xf32>
    %128 = arith.mulf %125, %127 : vector<4x512xf32>
    %129 = arith.addf %124, %128 : vector<4x512xf32>
    %c1_i32_73 = arith.constant 1 : i32
    %130 = tpu.dynamic_rotate %108 by %c1_i32_73 dim 1 : vector<4x512xf32>, i32 -> vector<4x512xf32>
    %c21 = arith.constant 21 : index
    %c0_74 = arith.constant 0 : index
    %c0_75 = arith.constant 0 : index
    %131 = vector.load %arg4[%c21, %c0_74, %c0_75] : memref<27x4x512xf32, #tpu.memory_space<vmem>>, vector<1x4x512xf32>
    %132 = vector.shape_cast %131 : vector<1x4x512xf32> to vector<4x512xf32>
    %133 = arith.mulf %130, %132 : vector<4x512xf32>
    %134 = arith.addf %129, %133 : vector<4x512xf32>
    %c511_i32_76 = arith.constant 511 : i32
    %135 = tpu.dynamic_rotate %108 by %c511_i32_76 dim 1 : vector<4x512xf32>, i32 -> vector<4x512xf32>
    %c23 = arith.constant 23 : index
    %c0_77 = arith.constant 0 : index
    %c0_78 = arith.constant 0 : index
    %136 = vector.load %arg4[%c23, %c0_77, %c0_78] : memref<27x4x512xf32, #tpu.memory_space<vmem>>, vector<1x4x512xf32>
    %137 = vector.shape_cast %136 : vector<1x4x512xf32> to vector<4x512xf32>
    %138 = arith.mulf %135, %137 : vector<4x512xf32>
    %139 = arith.addf %134, %138 : vector<4x512xf32>
    %c497_i32_79 = arith.constant 497 : i32
    %140 = tpu.dynamic_rotate %108 by %c497_i32_79 dim 1 : vector<4x512xf32>, i32 -> vector<4x512xf32>
    %c24 = arith.constant 24 : index
    %c0_80 = arith.constant 0 : index
    %c0_81 = arith.constant 0 : index
    %141 = vector.load %arg4[%c24, %c0_80, %c0_81] : memref<27x4x512xf32, #tpu.memory_space<vmem>>, vector<1x4x512xf32>
    %142 = vector.shape_cast %141 : vector<1x4x512xf32> to vector<4x512xf32>
    %143 = arith.mulf %140, %142 : vector<4x512xf32>
    %144 = arith.addf %139, %143 : vector<4x512xf32>
    %c496_i32_82 = arith.constant 496 : i32
    %145 = tpu.dynamic_rotate %108 by %c496_i32_82 dim 1 : vector<4x512xf32>, i32 -> vector<4x512xf32>
    %c25 = arith.constant 25 : index
    %c0_83 = arith.constant 0 : index
    %c0_84 = arith.constant 0 : index
    %146 = vector.load %arg4[%c25, %c0_83, %c0_84] : memref<27x4x512xf32, #tpu.memory_space<vmem>>, vector<1x4x512xf32>
    %147 = vector.shape_cast %146 : vector<1x4x512xf32> to vector<4x512xf32>
    %148 = arith.mulf %145, %147 : vector<4x512xf32>
    %149 = arith.addf %144, %148 : vector<4x512xf32>
    %c495_i32_85 = arith.constant 495 : i32
    %150 = tpu.dynamic_rotate %108 by %c495_i32_85 dim 1 : vector<4x512xf32>, i32 -> vector<4x512xf32>
    %c26 = arith.constant 26 : index
    %c0_86 = arith.constant 0 : index
    %c0_87 = arith.constant 0 : index
    %151 = vector.load %arg4[%c26, %c0_86, %c0_87] : memref<27x4x512xf32, #tpu.memory_space<vmem>>, vector<1x4x512xf32>
    %152 = vector.shape_cast %151 : vector<1x4x512xf32> to vector<4x512xf32>
    %153 = arith.mulf %150, %152 : vector<4x512xf32>
    %154 = arith.addf %149, %153 : vector<4x512xf32>
    %cst_88 = arith.constant 0.000000e+00 : f32
    %155 = vector.broadcast %cst_88 : f32 to vector<4x512xf32>
    %156 = arith.maximumf %154, %155 : vector<4x512xf32>
    %157 = vector.extract_strided_slice %7 {offsets = [12, 0], sizes = [4, 512], strides = [1, 1]} : vector<16x512xf32> to vector<4x512xf32>
    %158 = tpu.concatenate %56, %106, %156, %157 in 0 : vector<4x512xf32>, vector<4x512xf32>, vector<4x512xf32>, vector<4x512xf32> -> vector<16x512xf32>
    %c0_89 = arith.constant 0 : index
    %c0_90 = arith.constant 0 : index
    %159 = vector.load %arg6[%c0_89, %c0_90] : memref<32x16xf32, #tpu.memory_space<vmem>>, vector<32x16xf32>
    %cst_91 = arith.constant dense<0.000000e+00> : vector<32x512xf32>
    %160 = tpu.matmul %159, %158, %cst_91 {dimension_numbers = #tpu.dot_dimension_numbers<[1], [0], [0], [1], [0, 0, 1, 1], [], []>} : vector<32x16xf32>, vector<16x512xf32>, vector<32x512xf32> -> vector<32x512xf32>
    %c0_92 = arith.constant 0 : index
    %c0_93 = arith.constant 0 : index
    %161 = vector.load %arg7[%c0_92, %c0_93] : memref<32x1xf32, #tpu.memory_space<vmem>>, vector<32x1xf32>
    %162 = vector.broadcast %161 : vector<32x1xf32> to vector<32x512xf32>
    %163 = arith.addf %160, %162 : vector<32x512xf32>
    %c0_94 = arith.constant 0 : index
    %c0_95 = arith.constant 0 : index
    %164 = vector.load %arg1[%c0_94, %c0_95] : memref<32x512xf32, #tpu.memory_space<vmem>>, vector<32x512xf32>
    %165 = arith.addf %163, %164 : vector<32x512xf32>
    %cst_96 = arith.constant 0.000000e+00 : f32
    %166 = vector.broadcast %cst_96 : f32 to vector<32x512xf32>
    %167 = arith.maximumf %165, %166 : vector<32x512xf32>
    %c0_97 = arith.constant 0 : index
    %c0_98 = arith.constant 0 : index
    %168 = vector.load %arg8[%c0_97, %c0_98] : memref<32x512xf32, #tpu.memory_space<vmem>>, vector<32x512xf32>
    tpu.vector_store %arg8[%c0_97, %c0_98], %167 {strides = array<i32>} : memref<32x512xf32, #tpu.memory_space<vmem>>, vector<32x512xf32>,
    return
  }
  func.func @transform_0(%arg0: i32) -> (i32, i32) {
    %c0_i32 = arith.constant 0 : i32
    %c0_i32_0 = arith.constant 0 : i32
    return %c0_i32, %arg0 : i32, i32
  }
  func.func @transform_1(%arg0: i32) -> (i32, i32) {
    %c0_i32 = arith.constant 0 : i32
    %c0_i32_0 = arith.constant 0 : i32
    %c0_i32_1 = arith.constant 0 : i32
    return %c0_i32, %c0_i32_0 : i32, i32
  }
  func.func @transform_2(%arg0: i32) -> (i32, i32) {
    %c0_i32 = arith.constant 0 : i32
    %c0_i32_0 = arith.constant 0 : i32
    %c0_i32_1 = arith.constant 0 : i32
    return %c0_i32, %c0_i32_0 : i32, i32
  }
  func.func @transform_3(%arg0: i32) -> (i32, i32, i32) {
    %c0_i32 = arith.constant 0 : i32
    %c0_i32_0 = arith.constant 0 : i32
    %c0_i32_1 = arith.constant 0 : i32
    %c0_i32_2 = arith.constant 0 : i32
    return %c0_i32, %c0_i32_0, %c0_i32_1 : i32, i32, i32
  }
  func.func @transform_4(%arg0: i32) -> (i32, i32, i32) {
    %c0_i32 = arith.constant 0 : i32
    %c0_i32_0 = arith.constant 0 : i32
    %c0_i32_1 = arith.constant 0 : i32
    %c0_i32_2 = arith.constant 0 : i32
    return %c0_i32, %c0_i32_0, %c0_i32_1 : i32, i32, i32
  }
  func.func @transform_5(%arg0: i32) -> (i32, i32) {
    %c0_i32 = arith.constant 0 : i32
    %c0_i32_0 = arith.constant 0 : i32
    %c0_i32_1 = arith.constant 0 : i32
    return %c0_i32, %c0_i32_0 : i32, i32
  }
  func.func @transform_6(%arg0: i32) -> (i32, i32) {
    %c0_i32 = arith.constant 0 : i32
    %c0_i32_0 = arith.constant 0 : i32
    %c0_i32_1 = arith.constant 0 : i32
    return %c0_i32, %c0_i32_0 : i32, i32
  }
  func.func @transform_7(%arg0: i32) -> (i32, i32) {
    %c0_i32 = arith.constant 0 : i32
    %c0_i32_0 = arith.constant 0 : i32
    return %c0_i32, %arg0 : i32, i32
  }
}

</mosaic_0001>

<llo_original>
// kernel: bottle2neck_forward.1
$region0: #{bottle2neck_forward.1}
  #allocation0 [shape = 'u32[]', space=smem, size = 0x4, offset = 0x4, fixed_abs, tag = 'smem constant byte address 0x4 - core index']
  #allocation1 [shape = 'u32[72,128]{1,0:T(1,128)}', space=vmem, size = 0x9000, scoped, tag = 'internal scratch']
  %s0 = inlined_call_operand.vmem [shape: f32[32,512], index: 0, kind: input, shape index: {}]
  %s1 = inlined_call_operand.vmem [shape: f32[16,32], index: 1, kind: input, shape index: {}]
  %s2 = inlined_call_operand.vmem [shape: f32[16,1], index: 2, kind: input, shape index: {}]
  %s3 = inlined_call_operand.vmem [shape: f32[27,4,512], index: 3, kind: input, shape index: {}]
  %s4 = inlined_call_operand.vmem [shape: f32[3,4,512], index: 4, kind: input, shape index: {}]
  %s5 = inlined_call_operand.vmem [shape: f32[32,16], index: 5, kind: input, shape index: {}]
  %s6 = inlined_call_operand.vmem [shape: f32[32,1], index: 6, kind: input, shape index: {}]
  %s7 = inlined_call_operand.vmem [shape: f32[32,512], index: 7, kind: output, shape index: {}]
  %s8 = sld [smem:[#allocation0]]
  $region38: #{bottle2neck_forward.1} parent=0
    _
  %s10 = ssub.s32 1, %s8
  %s11 = scalar_select 0, %s10, %s8
  // Predicated region
  $region2: #{bottle2neck_forward.1} parent=0 // pred_check
    _
  $region3: #{bottle2neck_forward.1} parent=0 // pred_check_branch
    %13 = sbr.rel (0) target = $region5
  $region4: #{bottle2neck_forward.1} parent=0 // pred_region
    _
  $region5: #{bottle2neck_forward.1} parent=0 // pred_fallthru
    _
  // Predicated region
  $region6: #{bottle2neck_forward.1} parent=0 // pred_check
    _
  $region7: #{bottle2neck_forward.1} parent=0 // pred_check_branch
    %15 = sbr.rel (0) target = $region9
  $region8: #{bottle2neck_forward.1} parent=0 // pred_region
    _
  $region9: #{bottle2neck_forward.1} parent=0 // pred_fallthru
    _
  // Predicated region
  $region10: #{bottle2neck_forward.1} parent=0 // pred_check
    _
  $region11: #{bottle2neck_forward.1} parent=0 // pred_check_branch
    %17 = sbr.rel (0) target = $region13
  $region12: #{bottle2neck_forward.1} parent=0 // pred_region
    _
  $region13: #{bottle2neck_forward.1} parent=0 // pred_fallthru
    _
  // Predicated region
  $region14: #{bottle2neck_forward.1} parent=0 // pred_check
    _
  $region15: #{bottle2neck_forward.1} parent=0 // pred_check_branch
    %19 = sbr.rel (0) target = $region17
  $region16: #{bottle2neck_forward.1} parent=0 // pred_region
    _
  $region17: #{bottle2neck_forward.1} parent=0 // pred_fallthru
    _
  // Predicated region
  $region18: #{bottle2neck_forward.1} parent=0 // pred_check
    _
  $region19: #{bottle2neck_forward.1} parent=0 // pred_check_branch
    %21 = sbr.rel (0) target = $region21
  $region20: #{bottle2neck_forward.1} parent=0 // pred_region
    _
  $region21: #{bottle2neck_forward.1} parent=0 // pred_fallthru
    _
  // Predicated region
  $region22: #{bottle2neck_forward.1} parent=0 // pred_check
    _
  $region23: #{bottle2neck_forward.1} parent=0 // pred_check_branch
    %23 = sbr.rel (0) target = $region25
  $region24: #{bottle2neck_forward.1} parent=0 // pred_region
    _
  $region25: #{bottle2neck_forward.1} parent=0 // pred_fallthru
    _
  // Predicated region
  $region26: #{bottle2neck_forward.1} parent=0 // pred_check
    _
  $region27: #{bottle2neck_forward.1} parent=0 // pred_check_branch
    %25 = sbr.rel (0) target = $region29
  $region28: #{bottle2neck_forward.1} parent=0 // pred_region
    _
  $region29: #{bottle2neck_forward.1} parent=0 // pred_fallthru
    _
  %v26 = vld [vmem:[%s1] sm:$0xff]
  %v27 = vld [vmem:[%s1 + $0x8] sm:$0xff]
  %v28 = vld [vmem:[%s0] sm:$0xff]
  %v29 = vld [vmem:[%s0 + $0x8] sm:$0xff]
  %v30 = vld [vmem:[%s0 + $0x10] sm:$0xff]
  %v31 = vld [vmem:[%s0 + $0x18] sm:$0xff]
  %v32 = vld [vmem:[%s0 + $0x20] sm:$0xff]
  %v33 = vld [vmem:[%s0 + $0x28] sm:$0xff]
  %v34 = vld [vmem:[%s0 + $0x30] sm:$0xff]
  %v35 = vld [vmem:[%s0 + $0x38] sm:$0xff]
  %v36 = vld [vmem:[%s0 + $0x40] sm:$0xff]
  %v37 = vld [vmem:[%s0 + $0x48] sm:$0xff]
  %v38 = vld [vmem:[%s0 + $0x50] sm:$0xff]
  %v39 = vld [vmem:[%s0 + $0x58] sm:$0xff]
  %v40 = vld [vmem:[%s0 + $0x60] sm:$0xff]
  %v41 = vld [vmem:[%s0 + $0x68] sm:$0xff]
  %v42 = vld [vmem:[%s0 + $0x70] sm:$0xff]
  %v43 = vld [vmem:[%s0 + $0x78] sm:$0xff]
  %v44 = vld [vmem:[%s2] sm:$0xff]
  %v45 = vld [vmem:[%s2 + $0x8] sm:$0xff]
  %47 = vset.pattern.permute.xlu0 0
  %48 = vperm.xlu0 %47, %v44
  %v49 = vpop.permute.xlu0 %48
  %52 = vset.pattern.permute.xlu0 0
  %53 = vperm.xlu0 %52, %v45
  %v54 = vpop.permute.xlu0 %53
  %vm56 = vcmask 261120
  %v58 = vsel %vm56, %v26, 0
  %v61 = vsel %vm56, %v27, 0
  %63 = vmatpush.msra.mxu0 0.0
  %64 = vmatpush.msra.mxu0 0.0
  %65 = vmatpush.msra.mxu0 0.0
  %66 = vmatpush.msra.mxu0 0.0
  %67 = vmatpush.msra.mxu0 0.0
  %68 = vmatpush.msra.mxu0 0.0
  %69 = vmatpush.msra.mxu0 0.0
  %70 = vmatpush.msra.mxu0 0.0
  %71 = vmatpush.msra.mxu0 0.0
  %72 = vmatpush.msra.mxu0 0.0
  %73 = vmatpush.msra.mxu0 0.0
  %74 = vmatpush.msra.mxu0 0.0
  %75 = vmatpush.msra.mxu0 %v40
  %76 = vmatpush.msra.mxu0 %v36
  %77 = vmatpush.msra.mxu0 %v32
  %78 = vmatpush.msra.mxu0 %v28
  %79 = vmatmul.f32.gmra.mxu0 %v58
  %v80 = vpop.f32.mrf.mxu0
  %v81 = vadd.f32 %v49, %v80
  %82 = vmatmul.f32.gmra.mxu0 %v61
  %v83 = vpop.f32.mrf.mxu0
  %v84 = vadd.f32 %v54, %v83
  %85 = vdwg.mxu0
  %86 = vmatpush.msra.mxu0 0.0
  %87 = vmatpush.msra.mxu0 0.0
  %88 = vmatpush.msra.mxu0 0.0
  %89 = vmatpush.msra.mxu0 0.0
  %90 = vmatpush.msra.mxu0 0.0
  %91 = vmatpush.msra.mxu0 0.0
  %92 = vmatpush.msra.mxu0 0.0
  %93 = vmatpush.msra.mxu0 0.0
  %94 = vmatpush.msra.mxu0 0.0
  %95 = vmatpush.msra.mxu0 0.0
  %96 = vmatpush.msra.mxu0 0.0
  %97 = vmatpush.msra.mxu0 0.0
  %98 = vmatpush.msra.mxu0 %v41
  %99 = vmatpush.msra.mxu0 %v37
  %100 = vmatpush.msra.mxu0 %v33
  %101 = vmatpush.msra.mxu0 %v29
  %102 = vmatmul.f32.gmra.mxu0 %v58
  %v103 = vpop.f32.mrf.mxu0
  %v104 = vadd.f32 %v49, %v103
  %105 = vmatmul.f32.gmra.mxu0 %v61
  %v106 = vpop.f32.mrf.mxu0
  %v107 = vadd.f32 %v54, %v106
  %108 = vdwg.mxu0
  %109 = vmatpush.msra.mxu0 0.0
  %110 = vmatpush.msra.mxu0 0.0
  %111 = vmatpush.msra.mxu0 0.0
  %112 = vmatpush.msra.mxu0 0.0
  %113 = vmatpush.msra.mxu0 0.0
  %114 = vmatpush.msra.mxu0 0.0
  %115 = vmatpush.msra.mxu0 0.0
  %116 = vmatpush.msra.mxu0 0.0
  %117 = vmatpush.msra.mxu0 0.0
  %118 = vmatpush.msra.mxu0 0.0
  %119 = vmatpush.msra.mxu0 0.0
  %120 = vmatpush.msra.mxu0 0.0
  %121 = vmatpush.msra.mxu0 %v42
  %122 = vmatpush.msra.mxu0 %v38
  %123 = vmatpush.msra.mxu0 %v34
  %124 = vmatpush.msra.mxu0 %v30
  %125 = vmatmul.f32.gmra.mxu0 %v58
  %v126 = vpop.f32.mrf.mxu0
  %v127 = vadd.f32 %v49, %v126
  %128 = vmatmul.f32.gmra.mxu0 %v61
  %v129 = vpop.f32.mrf.mxu0
  %v130 = vadd.f32 %v54, %v129
  %131 = vdwg.mxu0
  %132 = vmatpush.msra.mxu0 0.0
  %133 = vmatpush.msra.mxu0 0.0
  %134 = vmatpush.msra.mxu0 0.0
  %135 = vmatpush.msra.mxu0 0.0
  %136 = vmatpush.msra.mxu0 0.0
  %137 = vmatpush.msra.mxu0 0.0
  %138 = vmatpush.msra.mxu0 0.0
  %139 = vmatpush.msra.mxu0 0.0
  %140 = vmatpush.msra.mxu0 0.0
  %141 = vmatpush.msra.mxu0 0.0
  %142 = vmatpush.msra.mxu0 0.0
  %143 = vmatpush.msra.mxu0 0.0
  %144 = vmatpush.msra.mxu0 %v43
  %145 = vmatpush.msra.mxu0 %v39
  %146 = vmatpush.msra.mxu0 %v35
  %147 = vmatpush.msra.mxu0 %v31
  %148 = vmatmul.f32.gmra.mxu0 %v58
  %v149 = vpop.f32.mrf.mxu0
  %v150 = vadd.f32 %v49, %v149
  %151 = vmatmul.f32.gmra.mxu0 %v61
  %v152 = vpop.f32.mrf.mxu0
  %v153 = vadd.f32 %v54, %v152
  %154 = vdwg.mxu0
  %v155 = vmax.f32 %v81, 0.0
  %v156 = vmax.f32 %v104, 0.0
  %v157 = vmax.f32 %v127, 0.0
  %v158 = vmax.f32 %v150, 0.0
  %v159 = vmax.f32 %v84, 0.0
  %v160 = vmax.f32 %v107, 0.0
  %v161 = vmax.f32 %v130, 0.0
  %v162 = vmax.f32 %v153, 0.0
  %v163 = vld [vmem:[%s4] sm:$0xff]
  %v164 = vld [vmem:[%s4 + $0x8] sm:$0xff]
  %s165 = scalar_lea.vmem %s3, 64
  %v166 = vld [vmem:[%s165] sm:$0xff]
  %v167 = vld [vmem:[%s165 + $0x8] sm:$0xff]
  %170 = vst [vmem:[#allocation1] ss:$2 sm:$0xff] %v166
  %s171 = scalar_lea.vmem [#allocation1], 16
  %172 = vst [vmem:[%s171] ss:$2 sm:$0xff] %v167
  %v173 = vld.sshfl [vmem:[#allocation1] sm:$0xff pattern:$0x75316420]
  %v174 = vld.sshfl [vmem:[#allocation1 + $0x8] sm:$0xff pattern:$0x75316420]
  %v175 = vld.sshfl [vmem:[#allocation1 + $0x10] sm:$0xff pattern:$0x75316420]
  %v176 = vld.sshfl [vmem:[#allocation1 + $0x18] sm:$0xff pattern:$0x75316420]
  %v181 = vmul.f32 %v155, %v173
  %v182 = vmul.f32 %v156, %v174
  %v183 = vmul.f32 %v157, %v175
  %v184 = vmul.f32 %v158, %v176
  %v189 = vrot.slane %v182, 4
  %v190 = vrot.slane %v184, 4
  %vm191 = vcmask 1043456
  %v192 = vsel %vm191, %v181, %v189
  %v193 = vsel %vm191, %v183, %v190
  %v196 = vadd.f32 %v163, %v192
  %v197 = vadd.f32 %v164, %v193
  %198 = vrot.lane.b32.xlu0 %v155, 17
  %v199 = vpop.permute.xlu0 %198
  %200 = vrot.lane.b32.xlu0 %v156, 17
  %v201 = vpop.permute.xlu0 %200
  %202 = vrot.lane.b32.xlu0 %v157, 17
  %v203 = vpop.permute.xlu0 %202
  %204 = vrot.lane.b32.xlu0 %v158, 17
  %v205 = vpop.permute.xlu0 %204
  %v206 = vlaneseq
  %v207 = vand.u32 %v206, 127
  %vm208 = vcmp.lt.s32.totalorder %v207, 17
  %v209 = vsel %vm208, %v203, %v205
  %v210 = vsel %vm208, %v201, %v203
  %v211 = vsel %vm208, %v199, %v201
  %v212 = vsel %vm208, %v205, %v199
  %v213 = vld [vmem:[%s3] sm:$0xff]
  %v214 = vld [vmem:[%s3 + $0x8] sm:$0xff]
  %217 = vst [vmem:[#allocation1] ss:$2 sm:$0xff] %v213
  %s218 = scalar_lea.vmem [#allocation1], 16
  %219 = vst [vmem:[%s218] ss:$2 sm:$0xff] %v214
  %v220 = vld.sshfl [vmem:[#allocation1] sm:$0xff pattern:$0x75316420]
  %v221 = vld.sshfl [vmem:[#allocation1 + $0x8] sm:$0xff pattern:$0x75316420]
  %v222 = vld.sshfl [vmem:[#allocation1 + $0x10] sm:$0xff pattern:$0x75316420]
  %v223 = vld.sshfl [vmem:[#allocation1 + $0x18] sm:$0xff pattern:$0x75316420]
  %v228 = vmul.f32 %v212, %v220
  %v229 = vmul.f32 %v211, %v221
  %v230 = vmul.f32 %v210, %v222
  %v231 = vmul.f32 %v209, %v223
  %v236 = vrot.slane %v229, 4
  %v237 = vrot.slane %v231, 4
  %v238 = vsel %vm191, %v228, %v236
  %v239 = vsel %vm191, %v230, %v237
  %v242 = vadd.f32 %v196, %v238
  %v243 = vadd.f32 %v197, %v239
  %244 = vrot.lane.b32.xlu0 %v155, 16
  %v245 = vpop.permute.xlu0 %244
  %246 = vrot.lane.b32.xlu0 %v156, 16
  %v247 = vpop.permute.xlu0 %246
  %248 = vrot.lane.b32.xlu0 %v157, 16
  %v249 = vpop.permute.xlu0 %248
  %250 = vrot.lane.b32.xlu0 %v158, 16
  %v251 = vpop.permute.xlu0 %250
  %vm252 = vcmp.lt.s32.totalorder %v207, 16
  %v253 = vsel %vm252, %v249, %v251
  %v254 = vsel %vm252, %v247, %v249
  %v255 = vsel %vm252, %v245, %v247
  %v256 = vsel %vm252, %v251, %v245
  %s257 = scalar_lea.vmem %s3, 16
  %v258 = vld [vmem:[%s257] sm:$0xff]
  %v259 = vld [vmem:[%s257 + $0x8] sm:$0xff]
  %262 = vst [vmem:[#allocation1] ss:$2 sm:$0xff] %v258
  %s263 = scalar_lea.vmem [#allocation1], 16
  %264 = vst [vmem:[%s263] ss:$2 sm:$0xff] %v259
  %v265 = vld.sshfl [vmem:[#allocation1] sm:$0xff pattern:$0x75316420]
  %v266 = vld.sshfl [vmem:[#allocation1 + $0x8] sm:$0xff pattern:$0x75316420]
  %v267 = vld.sshfl [vmem:[#allocation1 + $0x10] sm:$0xff pattern:$0x75316420]
  %v268 = vld.sshfl [vmem:[#allocation1 + $0x18] sm:$0xff pattern:$0x75316420]
  %v273 = vmul.f32 %v256, %v265
  %v274 = vmul.f32 %v255, %v266
  %v275 = vmul.f32 %v254, %v267
  %v276 = vmul.f32 %v253, %v268
  %v281 = vrot.slane %v274, 4
  %v282 = vrot.slane %v276, 4
  %v283 = vsel %vm191, %v273, %v281
  %v284 = vsel %vm191, %v275, %v282
  %v287 = vadd.f32 %v242, %v283
  %v288 = vadd.f32 %v243, %v284
  %289 = vrot.lane.b32.xlu0 %v155, 15
  %v290 = vpop.permute.xlu0 %289
  %291 = vrot.lane.b32.xlu0 %v156, 15
  %v292 = vpop.permute.xlu0 %291
  %293 = vrot.lane.b32.xlu0 %v157, 15
  %v294 = vpop.permute.xlu0 %293
  %295 = vrot.lane.b32.xlu0 %v158, 15
  %v296 = vpop.permute.xlu0 %295
  %vm297 = vcmp.lt.s32.totalorder %v207, 15
  %v298 = vsel %vm297, %v294, %v296
  %v299 = vsel %vm297, %v292, %v294
  %v300 = vsel %vm297, %v290, %v292
  %v301 = vsel %vm297, %v296, %v290
  %s302 = scalar_lea.vmem %s3, 32
  %v303 = vld [vmem:[%s302] sm:$0xff]
  %v304 = vld [vmem:[%s302 + $0x8] sm:$0xff]
  %307 = vst [vmem:[#allocation1] ss:$2 sm:$0xff] %v303
  %s308 = scalar_lea.vmem [#allocation1], 16
  %309 = vst [vmem:[%s308] ss:$2 sm:$0xff] %v304
  %v310 = vld.sshfl [vmem:[#allocation1] sm:$0xff pattern:$0x75316420]
  %v311 = vld.sshfl [vmem:[#allocation1 + $0x8] sm:$0xff pattern:$0x75316420]
  %v312 = vld.sshfl [vmem:[#allocation1 + $0x10] sm:$0xff pattern:$0x75316420]
  %v313 = vld.sshfl [vmem:[#allocation1 + $0x18] sm:$0xff pattern:$0x75316420]
  %v318 = vmul.f32 %v301, %v310
  %v319 = vmul.f32 %v300, %v311
  %v320 = vmul.f32 %v299, %v312
  %v321 = vmul.f32 %v298, %v313
  %v326 = vrot.slane %v319, 4
  %v327 = vrot.slane %v321, 4
  %v328 = vsel %vm191, %v318, %v326
  %v329 = vsel %vm191, %v320, %v327
  %v332 = vadd.f32 %v287, %v328
  %v333 = vadd.f32 %v288, %v329
  %334 = vrot.lane.b32.xlu0 %v155, 1
  %v335 = vpop.permute.xlu0 %334
  %336 = vrot.lane.b32.xlu0 %v156, 1
  %v337 = vpop.permute.xlu0 %336
  %338 = vrot.lane.b32.xlu0 %v157, 1
  %v339 = vpop.permute.xlu0 %338
  %340 = vrot.lane.b32.xlu0 %v158, 1
  %v341 = vpop.permute.xlu0 %340
  %vm342 = vcmp.lt.s32.totalorder %v207, 1
  %v343 = vsel %vm342, %v339, %v341
  %v344 = vsel %vm342, %v337, %v339
  %v345 = vsel %vm342, %v335, %v337
  %v346 = vsel %vm342, %v341, %v335
  %s347 = scalar_lea.vmem %s3, 48
  %v348 = vld [vmem:[%s347] sm:$0xff]
  %v349 = vld [vmem:[%s347 + $0x8] sm:$0xff]
  %352 = vst [vmem:[#allocation1] ss:$2 sm:$0xff] %v348
  %s353 = scalar_lea.vmem [#allocation1], 16
  %354 = vst [vmem:[%s353] ss:$2 sm:$0xff] %v349
  %v355 = vld.sshfl [vmem:[#allocation1] sm:$0xff pattern:$0x75316420]
  %v356 = vld.sshfl [vmem:[#allocation1 + $0x8] sm:$0xff pattern:$0x75316420]
  %v357 = vld.sshfl [vmem:[#allocation1 + $0x10] sm:$0xff pattern:$0x75316420]
  %v358 = vld.sshfl [vmem:[#allocation1 + $0x18] sm:$0xff pattern:$0x75316420]
  %v363 = vmul.f32 %v346, %v355
  %v364 = vmul.f32 %v345, %v356
  %v365 = vmul.f32 %v344, %v357
  %v366 = vmul.f32 %v343, %v358
  %v371 = vrot.slane %v364, 4
  %v372 = vrot.slane %v366, 4
  %v373 = vsel %vm191, %v363, %v371
  %v374 = vsel %vm191, %v365, %v372
  %v377 = vadd.f32 %v332, %v373
  %v378 = vadd.f32 %v333, %v374
  %379 = vrot.lane.b32.xlu0 %v155, 127
  %v380 = vpop.permute.xlu0 %379
  %381 = vrot.lane.b32.xlu0 %v156, 127
  %v382 = vpop.permute.xlu0 %381
  %383 = vrot.lane.b32.xlu0 %v157, 127
  %v384 = vpop.permute.xlu0 %383
  %385 = vrot.lane.b32.xlu0 %v158, 127
  %v386 = vpop.permute.xlu0 %385
  %vm387 = vcmp.lt.s32.totalorder %v207, 127
  %v388 = vsel %vm387, %v384, %v386
  %v389 = vsel %vm387, %v382, %v384
  %v390 = vsel %vm387, %v380, %v382
  %v391 = vsel %vm387, %v386, %v380
  %s392 = scalar_lea.vmem %s3, 80
  %v393 = vld [vmem:[%s392] sm:$0xff]
  %v394 = vld [vmem:[%s392 + $0x8] sm:$0xff]
  %397 = vst [vmem:[#allocation1] ss:$2 sm:$0xff] %v393
  %s398 = scalar_lea.vmem [#allocation1], 16
  %399 = vst [vmem:[%s398] ss:$2 sm:$0xff] %v394
  %v400 = vld.sshfl [vmem:[#allocation1] sm:$0xff pattern:$0x75316420]
  %v401 = vld.sshfl [vmem:[#allocation1 + $0x8] sm:$0xff pattern:$0x75316420]
  %v402 = vld.sshfl [vmem:[#allocation1 + $0x10] sm:$0xff pattern:$0x75316420]
  %v403 = vld.sshfl [vmem:[#allocation1 + $0x18] sm:$0xff pattern:$0x75316420]
  %v408 = vmul.f32 %v390, %v400
  %v409 = vmul.f32 %v389, %v401
  %v410 = vmul.f32 %v388, %v402
  %v411 = vmul.f32 %v391, %v403
  %v416 = vrot.slane %v409, 4
  %v417 = vrot.slane %v411, 4
  %v418 = vsel %vm191, %v408, %v416
  %v419 = vsel %vm191, %v410, %v417
  %v422 = vadd.f32 %v377, %v418
  %v423 = vadd.f32 %v378, %v419
  %424 = vrot.lane.b32.xlu0 %v155, 113
  %v425 = vpop.permute.xlu0 %424
  %426 = vrot.lane.b32.xlu0 %v156, 113
  %v427 = vpop.permute.xlu0 %426
  %428 = vrot.lane.b32.xlu0 %v157, 113
  %v429 = vpop.permute.xlu0 %428
  %430 = vrot.lane.b32.xlu0 %v158, 113
  %v431 = vpop.permute.xlu0 %430
  %vm432 = vcmp.lt.s32.totalorder %v207, 113
  %v433 = vsel %vm432, %v429, %v431
  %v434 = vsel %vm432, %v427, %v429
  %v435 = vsel %vm432, %v425, %v427
  %v436 = vsel %vm432, %v431, %v425
  %s437 = scalar_lea.vmem %s3, 96
  %v438 = vld [vmem:[%s437] sm:$0xff]
  %v439 = vld [vmem:[%s437 + $0x8] sm:$0xff]
  %442 = vst [vmem:[#allocation1] ss:$2 sm:$0xff] %v438
  %s443 = scalar_lea.vmem [#allocation1], 16
  %444 = vst [vmem:[%s443] ss:$2 sm:$0xff] %v439
  %v445 = vld.sshfl [vmem:[#allocation1] sm:$0xff pattern:$0x75316420]
  %v446 = vld.sshfl [vmem:[#allocation1 + $0x8] sm:$0xff pattern:$0x75316420]
  %v447 = vld.sshfl [vmem:[#allocation1 + $0x10] sm:$0xff pattern:$0x75316420]
  %v448 = vld.sshfl [vmem:[#allocation1 + $0x18] sm:$0xff pattern:$0x75316420]
  %v453 = vmul.f32 %v435, %v445
  %v454 = vmul.f32 %v434, %v446
  %v455 = vmul.f32 %v433, %v447
  %v456 = vmul.f32 %v436, %v448
  %v461 = vrot.slane %v454, 4
  %v462 = vrot.slane %v456, 4
  %v463 = vsel %vm191, %v453, %v461
  %v464 = vsel %vm191, %v455, %v462
  %v467 = vadd.f32 %v422, %v463
  %v468 = vadd.f32 %v423, %v464
  %469 = vrot.lane.b32.xlu0 %v155, 112
  %v470 = vpop.permute.xlu0 %469
  %471 = vrot.lane.b32.xlu0 %v156, 112
  %v472 = vpop.permute.xlu0 %471
  %473 = vrot.lane.b32.xlu0 %v157, 112
  %v474 = vpop.permute.xlu0 %473
  %475 = vrot.lane.b32.xlu0 %v158, 112
  %v476 = vpop.permute.xlu0 %475
  %vm477 = vcmp.lt.s32.totalorder %v207, 112
  %v478 = vsel %vm477, %v474, %v476
  %v479 = vsel %vm477, %v472, %v474
  %v480 = vsel %vm477, %v470, %v472
  %v481 = vsel %vm477, %v476, %v470
  %s482 = scalar_lea.vmem %s3, 112
  %v483 = vld [vmem:[%s482] sm:$0xff]
  %v484 = vld [vmem:[%s482 + $0x8] sm:$0xff]
  %487 = vst [vmem:[#allocation1] ss:$2 sm:$0xff] %v483
  %s488 = scalar_lea.vmem [#allocation1], 16
  %489 = vst [vmem:[%s488] ss:$2 sm:$0xff] %v484
  %v490 = vld.sshfl [vmem:[#allocation1] sm:$0xff pattern:$0x75316420]
  %v491 = vld.sshfl [vmem:[#allocation1 + $0x8] sm:$0xff pattern:$0x75316420]
  %v492 = vld.sshfl [vmem:[#allocation1 + $0x10] sm:$0xff pattern:$0x75316420]
  %v493 = vld.sshfl [vmem:[#allocation1 + $0x18] sm:$0xff pattern:$0x75316420]
  %v498 = vmul.f32 %v480, %v490
  %v499 = vmul.f32 %v479, %v491
  %v500 = vmul.f32 %v478, %v492
  %v501 = vmul.f32 %v481, %v493
  %v506 = vrot.slane %v499, 4
  %v507 = vrot.slane %v501, 4
  %v508 = vsel %vm191, %v498, %v506
  %v509 = vsel %vm191, %v500, %v507
  %v512 = vadd.f32 %v467, %v508
  %v513 = vadd.f32 %v468, %v509
  %514 = vrot.lane.b32.xlu0 %v155, 111
  %v515 = vpop.permute.xlu0 %514
  %516 = vrot.lane.b32.xlu0 %v156, 111
  %v517 = vpop.permute.xlu0 %516
  %518 = vrot.lane.b32.xlu0 %v157, 111
  %v519 = vpop.permute.xlu0 %518
  %520 = vrot.lane.b32.xlu0 %v158, 111
  %v521 = vpop.permute.xlu0 %520
  %vm522 = vcmp.lt.s32.totalorder %v207, 111
  %v523 = vsel %vm522, %v519, %v521
  %v524 = vsel %vm522, %v517, %v519
  %v525 = vsel %vm522, %v515, %v517
  %v526 = vsel %vm522, %v521, %v515
  %s527 = scalar_lea.vmem %s3, 128
  %v528 = vld [vmem:[%s527] sm:$0xff]
  %v529 = vld [vmem:[%s527 + $0x8] sm:$0xff]
  %532 = vst [vmem:[#allocation1] ss:$2 sm:$0xff] %v528
  %s533 = scalar_lea.vmem [#allocation1], 16
  %534 = vst [vmem:[%s533] ss:$2 sm:$0xff] %v529
  %v535 = vld.sshfl [vmem:[#allocation1] sm:$0xff pattern:$0x75316420]
  %v536 = vld.sshfl [vmem:[#allocation1 + $0x8] sm:$0xff pattern:$0x75316420]
  %v537 = vld.sshfl [vmem:[#allocation1 + $0x10] sm:$0xff pattern:$0x75316420]
  %v538 = vld.sshfl [vmem:[#allocation1 + $0x18] sm:$0xff pattern:$0x75316420]
  %v543 = vmul.f32 %v525, %v535
  %v544 = vmul.f32 %v524, %v536
  %v545 = vmul.f32 %v523, %v537
  %v546 = vmul.f32 %v526, %v538
  %v551 = vrot.slane %v544, 4
  %v552 = vrot.slane %v546, 4
  %v553 = vsel %vm191, %v543, %v551
  %v554 = vsel %vm191, %v545, %v552
  %v557 = vadd.f32 %v512, %v553
  %v558 = vadd.f32 %v513, %v554
  %v559 = vmax.f32 %v557, 0.0
  %v560 = vmax.f32 %v558, 0.0
  %565 = vst.sshfl [vmem:[#allocation1] sm:$0xff pattern:$0x75316420] %v155
  %566 = vst.sshfl [vmem:[#allocation1 + $0x8] sm:$0xff pattern:$0x75316420] %v156
  %567 = vst.sshfl [vmem:[#allocation1 + $0x10] sm:$0xff pattern:$0x75316420] %v157
  %568 = vst.sshfl [vmem:[#allocation1 + $0x18] sm:$0xff pattern:$0x75316420] %v158
  %s569 = scalar_lea.vmem [#allocation1], 1
  %v570 = vld [vmem:[%s569] ss:$2 sm:$0xff]
  %s571 = scalar_lea.vmem [#allocation1], 17
  %v572 = vld [vmem:[%s571] ss:$2 sm:$0xff]
  %v575 = vadd.f32 %v559, %v570
  %v576 = vadd.f32 %v560, %v572
  %s577 = scalar_lea.vmem %s4, 16
  %v578 = vld [vmem:[%s577] sm:$0xff]
  %v579 = vld [vmem:[%s577 + $0x8] sm:$0xff]
  %s580 = scalar_lea.vmem %s3, 208
  %v581 = vld [vmem:[%s580] sm:$0xff]
  %v582 = vld [vmem:[%s580 + $0x8] sm:$0xff]
  %v583 = vmul.f32 %v575, %v581
  %v584 = vmul.f32 %v576, %v582
  %v585 = vadd.f32 %v578, %v583
  %v586 = vadd.f32 %v579, %v584
  %589 = vst [vmem:[#allocation1] ss:$2 sm:$0xff] %v575
  %s590 = scalar_lea.vmem [#allocation1], 16
  %591 = vst [vmem:[%s590] ss:$2 sm:$0xff] %v576
  %v592 = vld.sshfl [vmem:[#allocation1] sm:$0xff pattern:$0x75316420]
  %v593 = vld.sshfl [vmem:[#allocation1 + $0x8] sm:$0xff pattern:$0x75316420]
  %v594 = vld.sshfl [vmem:[#allocation1 + $0x10] sm:$0xff pattern:$0x75316420]
  %v595 = vld.sshfl [vmem:[#allocation1 + $0x18] sm:$0xff pattern:$0x75316420]
  %600 = vrot.lane.b32.xlu0 %v592, 17
  %v601 = vpop.permute.xlu0 %600
  %602 = vrot.lane.b32.xlu0 %v593, 17
  %v603 = vpop.permute.xlu0 %602
  %604 = vrot.lane.b32.xlu0 %v594, 17
  %v605 = vpop.permute.xlu0 %604
  %606 = vrot.lane.b32.xlu0 %v595, 17
  %v607 = vpop.permute.xlu0 %606
  %v608 = vsel %vm208, %v605, %v607
  %v609 = vsel %vm208, %v603, %v605
  %v610 = vsel %vm208, %v601, %v603
  %v611 = vsel %vm208, %v607, %v601
  %s612 = scalar_lea.vmem %s3, 144
  %v613 = vld [vmem:[%s612] sm:$0xff]
  %v614 = vld [vmem:[%s612 + $0x8] sm:$0xff]
  %617 = vst [vmem:[#allocation1] ss:$2 sm:$0xff] %v613
  %s618 = scalar_lea.vmem [#allocation1], 16
  %619 = vst [vmem:[%s618] ss:$2 sm:$0xff] %v614
  %v620 = vld.sshfl [vmem:[#allocation1] sm:$0xff pattern:$0x75316420]
  %v621 = vld.sshfl [vmem:[#allocation1 + $0x8] sm:$0xff pattern:$0x75316420]
  %v622 = vld.sshfl [vmem:[#allocation1 + $0x10] sm:$0xff pattern:$0x75316420]
  %v623 = vld.sshfl [vmem:[#allocation1 + $0x18] sm:$0xff pattern:$0x75316420]
  %v628 = vmul.f32 %v611, %v620
  %v629 = vmul.f32 %v610, %v621
  %v630 = vmul.f32 %v609, %v622
  %v631 = vmul.f32 %v608, %v623
  %v636 = vrot.slane %v629, 4
  %v637 = vrot.slane %v631, 4
  %v638 = vsel %vm191, %v628, %v636
  %v639 = vsel %vm191, %v630, %v637
  %v642 = vadd.f32 %v585, %v638
  %v643 = vadd.f32 %v586, %v639
  %644 = vst [vmem:[#allocation1] ss:$2 sm:$0xff] %v575
  %s645 = scalar_lea.vmem [#allocation1], 16
  %646 = vst [vmem:[%s645] ss:$2 sm:$0xff] %v576
  %v647 = vld.sshfl [vmem:[#allocation1] sm:$0xff pattern:$0x75316420]
  %v648 = vld.sshfl [vmem:[#allocation1 + $0x8] sm:$0xff pattern:$0x75316420]
  %v649 = vld.sshfl [vmem:[#allocation1 + $0x10] sm:$0xff pattern:$0x75316420]
  %v650 = vld.sshfl [vmem:[#allocation1 + $0x18] sm:$0xff pattern:$0x75316420]
  %655 = vrot.lane.b32.xlu0 %v647, 16
  %v656 = vpop.permute.xlu0 %655
  %657 = vrot.lane.b32.xlu0 %v648, 16
  %v658 = vpop.permute.xlu0 %657
  %659 = vrot.lane.b32.xlu0 %v649, 16
  %v660 = vpop.permute.xlu0 %659
  %661 = vrot.lane.b32.xlu0 %v650, 16
  %v662 = vpop.permute.xlu0 %661
  %v663 = vsel %vm252, %v660, %v662
  %v664 = vsel %vm252, %v658, %v660
  %v665 = vsel %vm252, %v656, %v658
  %v666 = vsel %vm252, %v662, %v656
  %s667 = scalar_lea.vmem %s3, 160
  %v668 = vld [vmem:[%s667] sm:$0xff]
  %v669 = vld [vmem:[%s667 + $0x8] sm:$0xff]
  %672 = vst [vmem:[#allocation1] ss:$2 sm:$0xff] %v668
  %s673 = scalar_lea.vmem [#allocation1], 16
  %674 = vst [vmem:[%s673] ss:$2 sm:$0xff] %v669
  %v675 = vld.sshfl [vmem:[#allocation1] sm:$0xff pattern:$0x75316420]
  %v676 = vld.sshfl [vmem:[#allocation1 + $0x8] sm:$0xff pattern:$0x75316420]
  %v677 = vld.sshfl [vmem:[#allocation1 + $0x10] sm:$0xff pattern:$0x75316420]
  %v678 = vld.sshfl [vmem:[#allocation1 + $0x18] sm:$0xff pattern:$0x75316420]
  %v683 = vmul.f32 %v666, %v675
  %v684 = vmul.f32 %v665, %v676
  %v685 = vmul.f32 %v664, %v677
  %v686 = vmul.f32 %v663, %v678
  %v691 = vrot.slane %v684, 4
  %v692 = vrot.slane %v686, 4
  %v693 = vsel %vm191, %v683, %v691
  %v694 = vsel %vm191, %v685, %v692
  %v697 = vadd.f32 %v642, %v693
  %v698 = vadd.f32 %v643, %v694
  %699 = vst [vmem:[#allocation1] ss:$2 sm:$0xff] %v575
  %s700 = scalar_lea.vmem [#allocation1], 16
  %701 = vst [vmem:[%s700] ss:$2 sm:$0xff] %v576
  %v702 = vld.sshfl [vmem:[#allocation1] sm:$0xff pattern:$0x75316420]
  %v703 = vld.sshfl [vmem:[#allocation1 + $0x8] sm:$0xff pattern:$0x75316420]
  %v704 = vld.sshfl [vmem:[#allocation1 + $0x10] sm:$0xff pattern:$0x75316420]
  %v705 = vld.sshfl [vmem:[#allocation1 + $0x18] sm:$0xff pattern:$0x75316420]
  %710 = vrot.lane.b32.xlu0 %v702, 15
  %v711 = vpop.permute.xlu0 %710
  %712 = vrot.lane.b32.xlu0 %v703, 15
  %v713 = vpop.permute.xlu0 %712
  %714 = vrot.lane.b32.xlu0 %v704, 15
  %v715 = vpop.permute.xlu0 %714
  %716 = vrot.lane.b32.xlu0 %v705, 15
  %v717 = vpop.permute.xlu0 %716
  %v718 = vsel %vm297, %v715, %v717
  %v719 = vsel %vm297, %v713, %v715
  %v720 = vsel %vm297, %v711, %v713
  %v721 = vsel %vm297, %v717, %v711
  %s722 = scalar_lea.vmem %s3, 176
  %v723 = vld [vmem:[%s722] sm:$0xff]
  %v724 = vld [vmem:[%s722 + $0x8] sm:$0xff]
  %727 = vst [vmem:[#allocation1] ss:$2 sm:$0xff] %v723
  %s728 = scalar_lea.vmem [#allocation1], 16
  %729 = vst [vmem:[%s728] ss:$2 sm:$0xff] %v724
  %v730 = vld.sshfl [vmem:[#allocation1] sm:$0xff pattern:$0x75316420]
  %v731 = vld.sshfl [vmem:[#allocation1 + $0x8] sm:$0xff pattern:$0x75316420]
  %v732 = vld.sshfl [vmem:[#allocation1 + $0x10] sm:$0xff pattern:$0x75316420]
  %v733 = vld.sshfl [vmem:[#allocation1 + $0x18] sm:$0xff pattern:$0x75316420]
  %v738 = vmul.f32 %v721, %v730
  %v739 = vmul.f32 %v720, %v731
  %v740 = vmul.f32 %v719, %v732
  %v741 = vmul.f32 %v718, %v733
  %v746 = vrot.slane %v739, 4
  %v747 = vrot.slane %v741, 4
  %v748 = vsel %vm191, %v738, %v746
  %v749 = vsel %vm191, %v740, %v747
  %v752 = vadd.f32 %v697, %v748
  %v753 = vadd.f32 %v698, %v749
  %754 = vst [vmem:[#allocation1] ss:$2 sm:$0xff] %v575
  %s755 = scalar_lea.vmem [#allocation1], 16
  %756 = vst [vmem:[%s755] ss:$2 sm:$0xff] %v576
  %v757 = vld.sshfl [vmem:[#allocation1] sm:$0xff pattern:$0x75316420]
  %v758 = vld.sshfl [vmem:[#allocation1 + $0x8] sm:$0xff pattern:$0x75316420]
  %v759 = vld.sshfl [vmem:[#allocation1 + $0x10] sm:$0xff pattern:$0x75316420]
  %v760 = vld.sshfl [vmem:[#allocation1 + $0x18] sm:$0xff pattern:$0x75316420]
  %765 = vrot.lane.b32.xlu0 %v757, 1
  %v766 = vpop.permute.xlu0 %765
  %767 = vrot.lane.b32.xlu0 %v758, 1
  %v768 = vpop.permute.xlu0 %767
  %769 = vrot.lane.b32.xlu0 %v759, 1
  %v770 = vpop.permute.xlu0 %769
  %771 = vrot.lane.b32.xlu0 %v760, 1
  %v772 = vpop.permute.xlu0 %771
  %v773 = vsel %vm342, %v770, %v772
  %v774 = vsel %vm342, %v768, %v770
  %v775 = vsel %vm342, %v766, %v768
  %v776 = vsel %vm342, %v772, %v766
  %s777 = scalar_lea.vmem %s3, 192
  %v778 = vld [vmem:[%s777] sm:$0xff]
  %v779 = vld [vmem:[%s777 + $0x8] sm:$0xff]
  %782 = vst [vmem:[#allocation1] ss:$2 sm:$0xff] %v778
  %s783 = scalar_lea.vmem [#allocation1], 16
  %784 = vst [vmem:[%s783] ss:$2 sm:$0xff] %v779
  %v785 = vld.sshfl [vmem:[#allocation1] sm:$0xff pattern:$0x75316420]
  %v786 = vld.sshfl [vmem:[#allocation1 + $0x8] sm:$0xff pattern:$0x75316420]
  %v787 = vld.sshfl [vmem:[#allocation1 + $0x10] sm:$0xff pattern:$0x75316420]
  %v788 = vld.sshfl [vmem:[#allocation1 + $0x18] sm:$0xff pattern:$0x75316420]
  %v793 = vmul.f32 %v776, %v785
  %v794 = vmul.f32 %v775, %v786
  %v795 = vmul.f32 %v774, %v787
  %v796 = vmul.f32 %v773, %v788
  %v801 = vrot.slane %v794, 4
  %v802 = vrot.slane %v796, 4
  %v803 = vsel %vm191, %v793, %v801
  %v804 = vsel %vm191, %v795, %v802
  %v807 = vadd.f32 %v752, %v803
  %v808 = vadd.f32 %v753, %v804
  %809 = vst [vmem:[#allocation1] ss:$2 sm:$0xff] %v575
  %s810 = scalar_lea.vmem [#allocation1], 16
  %811 = vst [vmem:[%s810] ss:$2 sm:$0xff] %v576
  %v812 = vld.sshfl [vmem:[#allocation1] sm:$0xff pattern:$0x75316420]
  %v813 = vld.sshfl [vmem:[#allocation1 + $0x8] sm:$0xff pattern:$0x75316420]
  %v814 = vld.sshfl [vmem:[#allocation1 + $0x10] sm:$0xff pattern:$0x75316420]
  %v815 = vld.sshfl [vmem:[#allocation1 + $0x18] sm:$0xff pattern:$0x75316420]
  %820 = vrot.lane.b32.xlu0 %v812, 127
  %v821 = vpop.permute.xlu0 %820
  %822 = vrot.lane.b32.xlu0 %v813, 127
  %v823 = vpop.permute.xlu0 %822
  %824 = vrot.lane.b32.xlu0 %v814, 127
  %v825 = vpop.permute.xlu0 %824
  %826 = vrot.lane.b32.xlu0 %v815, 127
  %v827 = vpop.permute.xlu0 %826
  %v828 = vsel %vm387, %v825, %v827
  %v829 = vsel %vm387, %v823, %v825
  %v830 = vsel %vm387, %v821, %v823
  %v831 = vsel %vm387, %v827, %v821
  %s832 = scalar_lea.vmem %s3, 224
  %v833 = vld [vmem:[%s832] sm:$0xff]
  %v834 = vld [vmem:[%s832 + $0x8] sm:$0xff]
  %837 = vst [vmem:[#allocation1] ss:$2 sm:$0xff] %v833
  %s838 = scalar_lea.vmem [#allocation1], 16
  %839 = vst [vmem:[%s838] ss:$2 sm:$0xff] %v834
  %v840 = vld.sshfl [vmem:[#allocation1] sm:$0xff pattern:$0x75316420]
  %v841 = vld.sshfl [vmem:[#allocation1 + $0x8] sm:$0xff pattern:$0x75316420]
  %v842 = vld.sshfl [vmem:[#allocation1 + $0x10] sm:$0xff pattern:$0x75316420]
  %v843 = vld.sshfl [vmem:[#allocation1 + $0x18] sm:$0xff pattern:$0x75316420]
  %v848 = vmul.f32 %v830, %v840
  %v849 = vmul.f32 %v829, %v841
  %v850 = vmul.f32 %v828, %v842
  %v851 = vmul.f32 %v831, %v843
  %v856 = vrot.slane %v849, 4
  %v857 = vrot.slane %v851, 4
  %v858 = vsel %vm191, %v848, %v856
  %v859 = vsel %vm191, %v850, %v857
  %v862 = vadd.f32 %v807, %v858
  %v863 = vadd.f32 %v808, %v859
  %864 = vst [vmem:[#allocation1] ss:$2 sm:$0xff] %v575
  %s865 = scalar_lea.vmem [#allocation1], 16
  %866 = vst [vmem:[%s865] ss:$2 sm:$0xff] %v576
  %v867 = vld.sshfl [vmem:[#allocation1] sm:$0xff pattern:$0x75316420]
  %v868 = vld.sshfl [vmem:[#allocation1 + $0x8] sm:$0xff pattern:$0x75316420]
  %v869 = vld.sshfl [vmem:[#allocation1 + $0x10] sm:$0xff pattern:$0x75316420]
  %v870 = vld.sshfl [vmem:[#allocation1 + $0x18] sm:$0xff pattern:$0x75316420]
  %875 = vrot.lane.b32.xlu0 %v867, 113
  %v876 = vpop.permute.xlu0 %875
  %877 = vrot.lane.b32.xlu0 %v868, 113
  %v878 = vpop.permute.xlu0 %877
  %879 = vrot.lane.b32.xlu0 %v869, 113
  %v880 = vpop.permute.xlu0 %879
  %881 = vrot.lane.b32.xlu0 %v870, 113
  %v882 = vpop.permute.xlu0 %881
  %v883 = vsel %vm432, %v880, %v882
  %v884 = vsel %vm432, %v878, %v880
  %v885 = vsel %vm432, %v876, %v878
  %v886 = vsel %vm432, %v882, %v876
  %s887 = scalar_lea.vmem %s3, 240
  %v888 = vld [vmem:[%s887] sm:$0xff]
  %v889 = vld [vmem:[%s887 + $0x8] sm:$0xff]
  %892 = vst [vmem:[#allocation1] ss:$2 sm:$0xff] %v888
  %s893 = scalar_lea.vmem [#allocation1], 16
  %894 = vst [vmem:[%s893] ss:$2 sm:$0xff] %v889
  %v895 = vld.sshfl [vmem:[#allocation1] sm:$0xff pattern:$0x75316420]
  %v896 = vld.sshfl [vmem:[#allocation1 + $0x8] sm:$0xff pattern:$0x75316420]
  %v897 = vld.sshfl [vmem:[#allocation1 + $0x10] sm:$0xff pattern:$0x75316420]
  %v898 = vld.sshfl [vmem:[#allocation1 + $0x18] sm:$0xff pattern:$0x75316420]
  %v903 = vmul.f32 %v885, %v895
  %v904 = vmul.f32 %v884, %v896
  %v905 = vmul.f32 %v883, %v897
  %v906 = vmul.f32 %v886, %v898
  %v911 = vrot.slane %v904, 4
  %v912 = vrot.slane %v906, 4
  %v913 = vsel %vm191, %v903, %v911
  %v914 = vsel %vm191, %v905, %v912
  %v917 = vadd.f32 %v862, %v913
  %v918 = vadd.f32 %v863, %v914
  %919 = vst [vmem:[#allocation1] ss:$2 sm:$0xff] %v575
  %s920 = scalar_lea.vmem [#allocation1], 16
  %921 = vst [vmem:[%s920] ss:$2 sm:$0xff] %v576
  %v922 = vld.sshfl [vmem:[#allocation1] sm:$0xff pattern:$0x75316420]
  %v923 = vld.sshfl [vmem:[#allocation1 + $0x8] sm:$0xff pattern:$0x75316420]
  %v924 = vld.sshfl [vmem:[#allocation1 + $0x10] sm:$0xff pattern:$0x75316420]
  %v925 = vld.sshfl [vmem:[#allocation1 + $0x18] sm:$0xff pattern:$0x75316420]
  %930 = vrot.lane.b32.xlu0 %v922, 112
  %v931 = vpop.permute.xlu0 %930
  %932 = vrot.lane.b32.xlu0 %v923, 112
  %v933 = vpop.permute.xlu0 %932
  %934 = vrot.lane.b32.xlu0 %v924, 112
  %v935 = vpop.permute.xlu0 %934
  %936 = vrot.lane.b32.xlu0 %v925, 112
  %v937 = vpop.permute.xlu0 %936
  %v938 = vsel %vm477, %v935, %v937
  %v939 = vsel %vm477, %v933, %v935
  %v940 = vsel %vm477, %v931, %v933
  %v941 = vsel %vm477, %v937, %v931
  %s942 = scalar_lea.vmem %s3, 256
  %v943 = vld [vmem:[%s942] sm:$0xff]
  %v944 = vld [vmem:[%s942 + $0x8] sm:$0xff]
  %947 = vst [vmem:[#allocation1] ss:$2 sm:$0xff] %v943
  %s948 = scalar_lea.vmem [#allocation1], 16
  %949 = vst [vmem:[%s948] ss:$2 sm:$0xff] %v944
  %v950 = vld.sshfl [vmem:[#allocation1] sm:$0xff pattern:$0x75316420]
  %v951 = vld.sshfl [vmem:[#allocation1 + $0x8] sm:$0xff pattern:$0x75316420]
  %v952 = vld.sshfl [vmem:[#allocation1 + $0x10] sm:$0xff pattern:$0x75316420]
  %v953 = vld.sshfl [vmem:[#allocation1 + $0x18] sm:$0xff pattern:$0x75316420]
  %v958 = vmul.f32 %v940, %v950
  %v959 = vmul.f32 %v939, %v951
  %v960 = vmul.f32 %v938, %v952
  %v961 = vmul.f32 %v941, %v953
  %v966 = vrot.slane %v959, 4
  %v967 = vrot.slane %v961, 4
  %v968 = vsel %vm191, %v958, %v966
  %v969 = vsel %vm191, %v960, %v967
  %v972 = vadd.f32 %v917, %v968
  %v973 = vadd.f32 %v918, %v969
  %974 = vst [vmem:[#allocation1] ss:$2 sm:$0xff] %v575
  %s975 = scalar_lea.vmem [#allocation1], 16
  %976 = vst [vmem:[%s975] ss:$2 sm:$0xff] %v576
  %v977 = vld.sshfl [vmem:[#allocation1] sm:$0xff pattern:$0x75316420]
  %v978 = vld.sshfl [vmem:[#allocation1 + $0x8] sm:$0xff pattern:$0x75316420]
  %v979 = vld.sshfl [vmem:[#allocation1 + $0x10] sm:$0xff pattern:$0x75316420]
  %v980 = vld.sshfl [vmem:[#allocation1 + $0x18] sm:$0xff pattern:$0x75316420]
  %985 = vrot.lane.b32.xlu0 %v977, 111
  %v986 = vpop.permute.xlu0 %985
  %987 = vrot.lane.b32.xlu0 %v978, 111
  %v988 = vpop.permute.xlu0 %987
  %989 = vrot.lane.b32.xlu0 %v979, 111
  %v990 = vpop.permute.xlu0 %989
  %991 = vrot.lane.b32.xlu0 %v980, 111
  %v992 = vpop.permute.xlu0 %991
  %v993 = vsel %vm522, %v990, %v992
  %v994 = vsel %vm522, %v988, %v990
  %v995 = vsel %vm522, %v986, %v988
  %v996 = vsel %vm522, %v992, %v986
  %s997 = scalar_lea.vmem %s3, 272
  %v998 = vld [vmem:[%s997] sm:$0xff]
  %v999 = vld [vmem:[%s997 + $0x8] sm:$0xff]
  %1002 = vst [vmem:[#allocation1] ss:$2 sm:$0xff] %v998
  %s1003 = scalar_lea.vmem [#allocation1], 16
  %1004 = vst [vmem:[%s1003] ss:$2 sm:$0xff] %v999
  %v1005 = vld.sshfl [vmem:[#allocation1] sm:$0xff pattern:$0x75316420]
  %v1006 = vld.sshfl [vmem:[#allocation1 + $0x8] sm:$0xff pattern:$0x75316420]
  %v1007 = vld.sshfl [vmem:[#allocation1 + $0x10] sm:$0xff pattern:$0x75316420]
  %v1008 = vld.sshfl [vmem:[#allocation1 + $0x18] sm:$0xff pattern:$0x75316420]
  %v1013 = vmul.f32 %v995, %v1005
  %v1014 = vmul.f32 %v994, %v1006
  %v1015 = vmul.f32 %v993, %v1007
  %v1016 = vmul.f32 %v996, %v1008
  %v1021 = vrot.slane %v1014, 4
  %v1022 = vrot.slane %v1016, 4
  %v1023 = vsel %vm191, %v1013, %v1021
  %v1024 = vsel %vm191, %v1015, %v1022
  %v1027 = vadd.f32 %v972, %v1023
  %v1028 = vadd.f32 %v973, %v1024
  %v1029 = vmax.f32 %v1027, 0.0
  %v1030 = vmax.f32 %v1028, 0.0
  %v1035 = vrot.slane %v160, 4
  %v1036 = vrot.slane %v162, 4
  %v1037 = vsel %vm191, %v159, %v1035
  %v1038 = vsel %vm191, %v161, %v1036
  %v1041 = vadd.f32 %v1029, %v1037
  %v1042 = vadd.f32 %v1030, %v1038
  %s1043 = scalar_lea.vmem %s4, 32
  %v1044 = vld [vmem:[%s1043] sm:$0xff]
  %v1045 = vld [vmem:[%s1043 + $0x8] sm:$0xff]
  %s1046 = scalar_lea.vmem %s3, 352
  %v1047 = vld [vmem:[%s1046] sm:$0xff]
  %v1048 = vld [vmem:[%s1046 + $0x8] sm:$0xff]
  %v1049 = vmul.f32 %v1041, %v1047
  %v1050 = vmul.f32 %v1042, %v1048
  %v1051 = vadd.f32 %v1044, %v1049
  %v1052 = vadd.f32 %v1045, %v1050
  %1055 = vst [vmem:[#allocation1] ss:$2 sm:$0xff] %v1041
  %s1056 = scalar_lea.vmem [#allocation1], 16
  %1057 = vst [vmem:[%s1056] ss:$2 sm:$0xff] %v1042
  %v1058 = vld.sshfl [vmem:[#allocation1] sm:$0xff pattern:$0x75316420]
  %v1059 = vld.sshfl [vmem:[#allocation1 + $0x8] sm:$0xff pattern:$0x75316420]
  %v1060 = vld.sshfl [vmem:[#allocation1 + $0x10] sm:$0xff pattern:$0x75316420]
  %v1061 = vld.sshfl [vmem:[#allocation1 + $0x18] sm:$0xff pattern:$0x75316420]
  %1066 = vrot.lane.b32.xlu0 %v1058, 17
  %v1067 = vpop.permute.xlu0 %1066
  %1068 = vrot.lane.b32.xlu0 %v1059, 17
  %v1069 = vpop.permute.xlu0 %1068
  %1070 = vrot.lane.b32.xlu0 %v1060, 17
  %v1071 = vpop.permute.xlu0 %1070
  %1072 = vrot.lane.b32.xlu0 %v1061, 17
  %v1073 = vpop.permute.xlu0 %1072
  %v1074 = vsel %vm208, %v1071, %v1073
  %v1075 = vsel %vm208, %v1069, %v1071
  %v1076 = vsel %vm208, %v1067, %v1069
  %v1077 = vsel %vm208, %v1073, %v1067
  %s1078 = scalar_lea.vmem %s3, 288
  %v1079 = vld [vmem:[%s1078] sm:$0xff]
  %v1080 = vld [vmem:[%s1078 + $0x8] sm:$0xff]
  %1083 = vst [vmem:[#allocation1] ss:$2 sm:$0xff] %v1079
  %s1084 = scalar_lea.vmem [#allocation1], 16
  %1085 = vst [vmem:[%s1084] ss:$2 sm:$0xff] %v1080
  %v1086 = vld.sshfl [vmem:[#allocation1] sm:$0xff pattern:$0x75316420]
  %v1087 = vld.sshfl [vmem:[#allocation1 + $0x8] sm:$0xff pattern:$0x75316420]
  %v1088 = vld.sshfl [vmem:[#allocation1 + $0x10] sm:$0xff pattern:$0x75316420]
  %v1089 = vld.sshfl [vmem:[#allocation1 + $0x18] sm:$0xff pattern:$0x75316420]
  %v1094 = vmul.f32 %v1077, %v1086
  %v1095 = vmul.f32 %v1076, %v1087
  %v1096 = vmul.f32 %v1075, %v1088
  %v1097 = vmul.f32 %v1074, %v1089
  %v1102 = vrot.slane %v1095, 4
  %v1103 = vrot.slane %v1097, 4
  %v1104 = vsel %vm191, %v1094, %v1102
  %v1105 = vsel %vm191, %v1096, %v1103
  %v1108 = vadd.f32 %v1051, %v1104
  %v1109 = vadd.f32 %v1052, %v1105
  %1110 = vst [vmem:[#allocation1] ss:$2 sm:$0xff] %v1041
  %s1111 = scalar_lea.vmem [#allocation1], 16
  %1112 = vst [vmem:[%s1111] ss:$2 sm:$0xff] %v1042
  %v1113 = vld.sshfl [vmem:[#allocation1] sm:$0xff pattern:$0x75316420]
  %v1114 = vld.sshfl [vmem:[#allocation1 + $0x8] sm:$0xff pattern:$0x75316420]
  %v1115 = vld.sshfl [vmem:[#allocation1 + $0x10] sm:$0xff pattern:$0x75316420]
  %v1116 = vld.sshfl [vmem:[#allocation1 + $0x18] sm:$0xff pattern:$0x75316420]
  %1121 = vrot.lane.b32.xlu0 %v1113, 16
  %v1122 = vpop.permute.xlu0 %1121
  %1123 = vrot.lane.b32.xlu0 %v1114, 16
  %v1124 = vpop.permute.xlu0 %1123
  %1125 = vrot.lane.b32.xlu0 %v1115, 16
  %v1126 = vpop.permute.xlu0 %1125
  %1127 = vrot.lane.b32.xlu0 %v1116, 16
  %v1128 = vpop.permute.xlu0 %1127
  %v1129 = vsel %vm252, %v1126, %v1128
  %v1130 = vsel %vm252, %v1124, %v1126
  %v1131 = vsel %vm252, %v1122, %v1124
  %v1132 = vsel %vm252, %v1128, %v1122
  %s1133 = scalar_lea.vmem %s3, 304
  %v1134 = vld [vmem:[%s1133] sm:$0xff]
  %v1135 = vld [vmem:[%s1133 + $0x8] sm:$0xff]
  %1138 = vst [vmem:[#allocation1] ss:$2 sm:$0xff] %v1134
  %s1139 = scalar_lea.vmem [#allocation1], 16
  %1140 = vst [vmem:[%s1139] ss:$2 sm:$0xff] %v1135
  %v1141 = vld.sshfl [vmem:[#allocation1] sm:$0xff pattern:$0x75316420]
  %v1142 = vld.sshfl [vmem:[#allocation1 + $0x8] sm:$0xff pattern:$0x75316420]
  %v1143 = vld.sshfl [vmem:[#allocation1 + $0x10] sm:$0xff pattern:$0x75316420]
  %v1144 = vld.sshfl [vmem:[#allocation1 + $0x18] sm:$0xff pattern:$0x75316420]
  %v1149 = vmul.f32 %v1132, %v1141
  %v1150 = vmul.f32 %v1131, %v1142
  %v1151 = vmul.f32 %v1130, %v1143
  %v1152 = vmul.f32 %v1129, %v1144
  %v1157 = vrot.slane %v1150, 4
  %v1158 = vrot.slane %v1152, 4
  %v1159 = vsel %vm191, %v1149, %v1157
  %v1160 = vsel %vm191, %v1151, %v1158
  %v1163 = vadd.f32 %v1108, %v1159
  %v1164 = vadd.f32 %v1109, %v1160
  %1165 = vst [vmem:[#allocation1] ss:$2 sm:$0xff] %v1041
  %s1166 = scalar_lea.vmem [#allocation1], 16
  %1167 = vst [vmem:[%s1166] ss:$2 sm:$0xff] %v1042
  %v1168 = vld.sshfl [vmem:[#allocation1] sm:$0xff pattern:$0x75316420]
  %v1169 = vld.sshfl [vmem:[#allocation1 + $0x8] sm:$0xff pattern:$0x75316420]
  %v1170 = vld.sshfl [vmem:[#allocation1 + $0x10] sm:$0xff pattern:$0x75316420]
  %v1171 = vld.sshfl [vmem:[#allocation1 + $0x18] sm:$0xff pattern:$0x75316420]
  %1176 = vrot.lane.b32.xlu0 %v1168, 15
  %v1177 = vpop.permute.xlu0 %1176
  %1178 = vrot.lane.b32.xlu0 %v1169, 15
  %v1179 = vpop.permute.xlu0 %1178
  %1180 = vrot.lane.b32.xlu0 %v1170, 15
  %v1181 = vpop.permute.xlu0 %1180
  %1182 = vrot.lane.b32.xlu0 %v1171, 15
  %v1183 = vpop.permute.xlu0 %1182
  %v1184 = vsel %vm297, %v1181, %v1183
  %v1185 = vsel %vm297, %v1179, %v1181
  %v1186 = vsel %vm297, %v1177, %v1179
  %v1187 = vsel %vm297, %v1183, %v1177
  %s1188 = scalar_lea.vmem %s3, 320
  %v1189 = vld [vmem:[%s1188] sm:$0xff]
  %v1190 = vld [vmem:[%s1188 + $0x8] sm:$0xff]
  %1193 = vst [vmem:[#allocation1] ss:$2 sm:$0xff] %v1189
  %s1194 = scalar_lea.vmem [#allocation1], 16
  %1195 = vst [vmem:[%s1194] ss:$2 sm:$0xff] %v1190
  %v1196 = vld.sshfl [vmem:[#allocation1] sm:$0xff pattern:$0x75316420]
  %v1197 = vld.sshfl [vmem:[#allocation1 + $0x8] sm:$0xff pattern:$0x75316420]
  %v1198 = vld.sshfl [vmem:[#allocation1 + $0x10] sm:$0xff pattern:$0x75316420]
  %v1199 = vld.sshfl [vmem:[#allocation1 + $0x18] sm:$0xff pattern:$0x75316420]
  %v1204 = vmul.f32 %v1187, %v1196
  %v1205 = vmul.f32 %v1186, %v1197
  %v1206 = vmul.f32 %v1185, %v1198
  %v1207 = vmul.f32 %v1184, %v1199
  %v1212 = vrot.slane %v1205, 4
  %v1213 = vrot.slane %v1207, 4
  %v1214 = vsel %vm191, %v1204, %v1212
  %v1215 = vsel %vm191, %v1206, %v1213
  %v1218 = vadd.f32 %v1163, %v1214
  %v1219 = vadd.f32 %v1164, %v1215
  %1220 = vst [vmem:[#allocation1] ss:$2 sm:$0xff] %v1041
  %s1221 = scalar_lea.vmem [#allocation1], 16
  %1222 = vst [vmem:[%s1221] ss:$2 sm:$0xff] %v1042
  %v1223 = vld.sshfl [vmem:[#allocation1] sm:$0xff pattern:$0x75316420]
  %v1224 = vld.sshfl [vmem:[#allocation1 + $0x8] sm:$0xff pattern:$0x75316420]
  %v1225 = vld.sshfl [vmem:[#allocation1 + $0x10] sm:$0xff pattern:$0x75316420]
  %v1226 = vld.sshfl [vmem:[#allocation1 + $0x18] sm:$0xff pattern:$0x75316420]
  %1231 = vrot.lane.b32.xlu0 %v1223, 1
  %v1232 = vpop.permute.xlu0 %1231
  %1233 = vrot.lane.b32.xlu0 %v1224, 1
  %v1234 = vpop.permute.xlu0 %1233
  %1235 = vrot.lane.b32.xlu0 %v1225, 1
  %v1236 = vpop.permute.xlu0 %1235
  %1237 = vrot.lane.b32.xlu0 %v1226, 1
  %v1238 = vpop.permute.xlu0 %1237
  %v1239 = vsel %vm342, %v1236, %v1238
  %v1240 = vsel %vm342, %v1234, %v1236
  %v1241 = vsel %vm342, %v1232, %v1234
  %v1242 = vsel %vm342, %v1238, %v1232
  %s1243 = scalar_lea.vmem %s3, 336
  %v1244 = vld [vmem:[%s1243] sm:$0xff]
  %v1245 = vld [vmem:[%s1243 + $0x8] sm:$0xff]
  %1248 = vst [vmem:[#allocation1] ss:$2 sm:$0xff] %v1244
  %s1249 = scalar_lea.vmem [#allocation1], 16
  %1250 = vst [vmem:[%s1249] ss:$2 sm:$0xff] %v1245
  %v1251 = vld.sshfl [vmem:[#allocation1] sm:$0xff pattern:$0x75316420]
  %v1252 = vld.sshfl [vmem:[#allocation1 + $0x8] sm:$0xff pattern:$0x75316420]
  %v1253 = vld.sshfl [vmem:[#allocation1 + $0x10] sm:$0xff pattern:$0x75316420]
  %v1254 = vld.sshfl [vmem:[#allocation1 + $0x18] sm:$0xff pattern:$0x75316420]
  %v1259 = vmul.f32 %v1242, %v1251
  %v1260 = vmul.f32 %v1241, %v1252
  %v1261 = vmul.f32 %v1240, %v1253
  %v1262 = vmul.f32 %v1239, %v1254
  %v1267 = vrot.slane %v1260, 4
  %v1268 = vrot.slane %v1262, 4
  %v1269 = vsel %vm191, %v1259, %v1267
  %v1270 = vsel %vm191, %v1261, %v1268
  %v1273 = vadd.f32 %v1218, %v1269
  %v1274 = vadd.f32 %v1219, %v1270
  %1275 = vst [vmem:[#allocation1] ss:$2 sm:$0xff] %v1041
  %s1276 = scalar_lea.vmem [#allocation1], 16
  %1277 = vst [vmem:[%s1276] ss:$2 sm:$0xff] %v1042
  %v1278 = vld.sshfl [vmem:[#allocation1] sm:$0xff pattern:$0x75316420]
  %v1279 = vld.sshfl [vmem:[#allocation1 + $0x8] sm:$0xff pattern:$0x75316420]
  %v1280 = vld.sshfl [vmem:[#allocation1 + $0x10] sm:$0xff pattern:$0x75316420]
  %v1281 = vld.sshfl [vmem:[#allocation1 + $0x18] sm:$0xff pattern:$0x75316420]
  %1286 = vrot.lane.b32.xlu0 %v1278, 127
  %v1287 = vpop.permute.xlu0 %1286
  %1288 = vrot.lane.b32.xlu0 %v1279, 127
  %v1289 = vpop.permute.xlu0 %1288
  %1290 = vrot.lane.b32.xlu0 %v1280, 127
  %v1291 = vpop.permute.xlu0 %1290
  %1292 = vrot.lane.b32.xlu0 %v1281, 127
  %v1293 = vpop.permute.xlu0 %1292
  %v1294 = vsel %vm387, %v1291, %v1293
  %v1295 = vsel %vm387, %v1289, %v1291
  %v1296 = vsel %vm387, %v1287, %v1289
  %v1297 = vsel %vm387, %v1293, %v1287
  %s1298 = scalar_lea.vmem %s3, 368
  %v1299 = vld [vmem:[%s1298] sm:$0xff]
  %v1300 = vld [vmem:[%s1298 + $0x8] sm:$0xff]
  %1303 = vst [vmem:[#allocation1] ss:$2 sm:$0xff] %v1299
  %s1304 = scalar_lea.vmem [#allocation1], 16
  %1305 = vst [vmem:[%s1304] ss:$2 sm:$0xff] %v1300
  %v1306 = vld.sshfl [vmem:[#allocation1] sm:$0xff pattern:$0x75316420]
  %v1307 = vld.sshfl [vmem:[#allocation1 + $0x8] sm:$0xff pattern:$0x75316420]
  %v1308 = vld.sshfl [vmem:[#allocation1 + $0x10] sm:$0xff pattern:$0x75316420]
  %v1309 = vld.sshfl [vmem:[#allocation1 + $0x18] sm:$0xff pattern:$0x75316420]
  %v1314 = vmul.f32 %v1296, %v1306
  %v1315 = vmul.f32 %v1295, %v1307
  %v1316 = vmul.f32 %v1294, %v1308
  %v1317 = vmul.f32 %v1297, %v1309
  %v1322 = vrot.slane %v1315, 4
  %v1323 = vrot.slane %v1317, 4
  %v1324 = vsel %vm191, %v1314, %v1322
  %v1325 = vsel %vm191, %v1316, %v1323
  %v1328 = vadd.f32 %v1273, %v1324
  %v1329 = vadd.f32 %v1274, %v1325
  %1330 = vst [vmem:[#allocation1] ss:$2 sm:$0xff] %v1041
  %s1331 = scalar_lea.vmem [#allocation1], 16
  %1332 = vst [vmem:[%s1331] ss:$2 sm:$0xff] %v1042
  %v1333 = vld.sshfl [vmem:[#allocation1] sm:$0xff pattern:$0x75316420]
  %v1334 = vld.sshfl [vmem:[#allocation1 + $0x8] sm:$0xff pattern:$0x75316420]
  %v1335 = vld.sshfl [vmem:[#allocation1 + $0x10] sm:$0xff pattern:$0x75316420]
  %v1336 = vld.sshfl [vmem:[#allocation1 + $0x18] sm:$0xff pattern:$0x75316420]
  %1341 = vrot.lane.b32.xlu0 %v1333, 113
  %v1342 = vpop.permute.xlu0 %1341
  %1343 = vrot.lane.b32.xlu0 %v1334, 113
  %v1344 = vpop.permute.xlu0 %1343
  %1345 = vrot.lane.b32.xlu0 %v1335, 113
  %v1346 = vpop.permute.xlu0 %1345
  %1347 = vrot.lane.b32.xlu0 %v1336, 113
  %v1348 = vpop.permute.xlu0 %1347
  %v1349 = vsel %vm432, %v1346, %v1348
  %v1350 = vsel %vm432, %v1344, %v1346
  %v1351 = vsel %vm432, %v1342, %v1344
  %v1352 = vsel %vm432, %v1348, %v1342
  %s1353 = scalar_lea.vmem %s3, 384
  %v1354 = vld [vmem:[%s1353] sm:$0xff]
  %v1355 = vld [vmem:[%s1353 + $0x8] sm:$0xff]
  %1358 = vst [vmem:[#allocation1] ss:$2 sm:$0xff] %v1354
  %s1359 = scalar_lea.vmem [#allocation1], 16
  %1360 = vst [vmem:[%s1359] ss:$2 sm:$0xff] %v1355
  %v1361 = vld.sshfl [vmem:[#allocation1] sm:$0xff pattern:$0x75316420]
  %v1362 = vld.sshfl [vmem:[#allocation1 + $0x8] sm:$0xff pattern:$0x75316420]
  %v1363 = vld.sshfl [vmem:[#allocation1 + $0x10] sm:$0xff pattern:$0x75316420]
  %v1364 = vld.sshfl [vmem:[#allocation1 + $0x18] sm:$0xff pattern:$0x75316420]
  %v1369 = vmul.f32 %v1351, %v1361
  %v1370 = vmul.f32 %v1350, %v1362
  %v1371 = vmul.f32 %v1349, %v1363
  %v1372 = vmul.f32 %v1352, %v1364
  %v1377 = vrot.slane %v1370, 4
  %v1378 = vrot.slane %v1372, 4
  %v1379 = vsel %vm191, %v1369, %v1377
  %v1380 = vsel %vm191, %v1371, %v1378
  %v1383 = vadd.f32 %v1328, %v1379
  %v1384 = vadd.f32 %v1329, %v1380
  %1385 = vst [vmem:[#allocation1] ss:$2 sm:$0xff] %v1041
  %s1386 = scalar_lea.vmem [#allocation1], 16
  %1387 = vst [vmem:[%s1386] ss:$2 sm:$0xff] %v1042
  %v1388 = vld.sshfl [vmem:[#allocation1] sm:$0xff pattern:$0x75316420]
  %v1389 = vld.sshfl [vmem:[#allocation1 + $0x8] sm:$0xff pattern:$0x75316420]
  %v1390 = vld.sshfl [vmem:[#allocation1 + $0x10] sm:$0xff pattern:$0x75316420]
  %v1391 = vld.sshfl [vmem:[#allocation1 + $0x18] sm:$0xff pattern:$0x75316420]
  %1396 = vrot.lane.b32.xlu0 %v1388, 112
  %v1397 = vpop.permute.xlu0 %1396
  %1398 = vrot.lane.b32.xlu0 %v1389, 112
  %v1399 = vpop.permute.xlu0 %1398
  %1400 = vrot.lane.b32.xlu0 %v1390, 112
  %v1401 = vpop.permute.xlu0 %1400
  %1402 = vrot.lane.b32.xlu0 %v1391, 112
  %v1403 = vpop.permute.xlu0 %1402
  %v1404 = vsel %vm477, %v1401, %v1403
  %v1405 = vsel %vm477, %v1399, %v1401
  %v1406 = vsel %vm477, %v1397, %v1399
  %v1407 = vsel %vm477, %v1403, %v1397
  %s1408 = scalar_lea.vmem %s3, 400
  %v1409 = vld [vmem:[%s1408] sm:$0xff]
  %v1410 = vld [vmem:[%s1408 + $0x8] sm:$0xff]
  %1413 = vst [vmem:[#allocation1] ss:$2 sm:$0xff] %v1409
  %s1414 = scalar_lea.vmem [#allocation1], 16
  %1415 = vst [vmem:[%s1414] ss:$2 sm:$0xff] %v1410
  %v1416 = vld.sshfl [vmem:[#allocation1] sm:$0xff pattern:$0x75316420]
  %v1417 = vld.sshfl [vmem:[#allocation1 + $0x8] sm:$0xff pattern:$0x75316420]
  %v1418 = vld.sshfl [vmem:[#allocation1 + $0x10] sm:$0xff pattern:$0x75316420]
  %v1419 = vld.sshfl [vmem:[#allocation1 + $0x18] sm:$0xff pattern:$0x75316420]
  %v1424 = vmul.f32 %v1406, %v1416
  %v1425 = vmul.f32 %v1405, %v1417
  %v1426 = vmul.f32 %v1404, %v1418
  %v1427 = vmul.f32 %v1407, %v1419
  %v1432 = vrot.slane %v1425, 4
  %v1433 = vrot.slane %v1427, 4
  %v1434 = vsel %vm191, %v1424, %v1432
  %v1435 = vsel %vm191, %v1426, %v1433
  %v1438 = vadd.f32 %v1383, %v1434
  %v1439 = vadd.f32 %v1384, %v1435
  %1440 = vst [vmem:[#allocation1] ss:$2 sm:$0xff] %v1041
  %s1441 = scalar_lea.vmem [#allocation1], 16
  %1442 = vst [vmem:[%s1441] ss:$2 sm:$0xff] %v1042
  %v1443 = vld.sshfl [vmem:[#allocation1] sm:$0xff pattern:$0x75316420]
  %v1444 = vld.sshfl [vmem:[#allocation1 + $0x8] sm:$0xff pattern:$0x75316420]
  %v1445 = vld.sshfl [vmem:[#allocation1 + $0x10] sm:$0xff pattern:$0x75316420]
  %v1446 = vld.sshfl [vmem:[#allocation1 + $0x18] sm:$0xff pattern:$0x75316420]
  %1451 = vrot.lane.b32.xlu0 %v1443, 111
  %v1452 = vpop.permute.xlu0 %1451
  %1453 = vrot.lane.b32.xlu0 %v1444, 111
  %v1454 = vpop.permute.xlu0 %1453
  %1455 = vrot.lane.b32.xlu0 %v1445, 111
  %v1456 = vpop.permute.xlu0 %1455
  %1457 = vrot.lane.b32.xlu0 %v1446, 111
  %v1458 = vpop.permute.xlu0 %1457
  %v1459 = vsel %vm522, %v1456, %v1458
  %v1460 = vsel %vm522, %v1454, %v1456
  %v1461 = vsel %vm522, %v1452, %v1454
  %v1462 = vsel %vm522, %v1458, %v1452
  %s1463 = scalar_lea.vmem %s3, 416
  %v1464 = vld [vmem:[%s1463] sm:$0xff]
  %v1465 = vld [vmem:[%s1463 + $0x8] sm:$0xff]
  %1468 = vst [vmem:[#allocation1] ss:$2 sm:$0xff] %v1464
  %s1469 = scalar_lea.vmem [#allocation1], 16
  %1470 = vst [vmem:[%s1469] ss:$2 sm:$0xff] %v1465
  %v1471 = vld.sshfl [vmem:[#allocation1] sm:$0xff pattern:$0x75316420]
  %v1472 = vld.sshfl [vmem:[#allocation1 + $0x8] sm:$0xff pattern:$0x75316420]
  %v1473 = vld.sshfl [vmem:[#allocation1 + $0x10] sm:$0xff pattern:$0x75316420]
  %v1474 = vld.sshfl [vmem:[#allocation1 + $0x18] sm:$0xff pattern:$0x75316420]
  %v1479 = vmul.f32 %v1461, %v1471
  %v1480 = vmul.f32 %v1460, %v1472
  %v1481 = vmul.f32 %v1459, %v1473
  %v1482 = vmul.f32 %v1462, %v1474
  %v1487 = vrot.slane %v1480, 4
  %v1488 = vrot.slane %v1482, 4
  %v1489 = vsel %vm191, %v1479, %v1487
  %v1490 = vsel %vm191, %v1481, %v1488
  %v1493 = vadd.f32 %v1438, %v1489
  %v1494 = vadd.f32 %v1439, %v1490
  %v1495 = vmax.f32 %v1493, 0.0
  %v1496 = vmax.f32 %v1494, 0.0
  %1499 = vst [vmem:[#allocation1] ss:$2 sm:$0xff] %v559
  %s1500 = scalar_lea.vmem [#allocation1], 16
  %1501 = vst [vmem:[%s1500] ss:$2 sm:$0xff] %v560
  %v1502 = vld.sshfl [vmem:[#allocation1] sm:$0xff pattern:$0x75316420]
  %v1503 = vld.sshfl [vmem:[#allocation1 + $0x8] sm:$0xff pattern:$0x75316420]
  %v1504 = vld.sshfl [vmem:[#allocation1 + $0x10] sm:$0xff pattern:$0x75316420]
  %v1505 = vld.sshfl [vmem:[#allocation1 + $0x18] sm:$0xff pattern:$0x75316420]
  %s1512 = scalar_lea.vmem [#allocation1], 1
  %1513 = vst [vmem:[%s1512] ss:$2 sm:$0xff] %v1029
  %s1514 = scalar_lea.vmem [#allocation1], 17
  %1515 = vst [vmem:[%s1514] ss:$2 sm:$0xff] %v1030
  %v1516 = vld.sshfl [vmem:[#allocation1] sm:$0xff pattern:$0x75316420]
  %v1517 = vld.sshfl [vmem:[#allocation1 + $0x8] sm:$0xff pattern:$0x75316420]
  %v1518 = vld.sshfl [vmem:[#allocation1 + $0x10] sm:$0xff pattern:$0x75316420]
  %v1519 = vld.sshfl [vmem:[#allocation1 + $0x18] sm:$0xff pattern:$0x75316420]
  %1526 = vst [vmem:[#allocation1] ss:$2 sm:$0xff] %v1495
  %s1527 = scalar_lea.vmem [#allocation1], 16
  %1528 = vst [vmem:[%s1527] ss:$2 sm:$0xff] %v1496
  %v1529 = vld.sshfl [vmem:[#allocation1] sm:$0xff pattern:$0x75316420]
  %v1530 = vld.sshfl [vmem:[#allocation1 + $0x8] sm:$0xff pattern:$0x75316420]
  %v1531 = vld.sshfl [vmem:[#allocation1 + $0x10] sm:$0xff pattern:$0x75316420]
  %v1532 = vld.sshfl [vmem:[#allocation1 + $0x18] sm:$0xff pattern:$0x75316420]
  %v1537 = vsel %vm191, %v1502, %v1516
  %v1538 = vsel %vm191, %v1503, %v1517
  %v1539 = vsel %vm191, %v1504, %v1518
  %v1540 = vsel %vm191, %v1505, %v1519
  %v1541 = vsel %vm191, %v1529, %v159
  %v1542 = vsel %vm191, %v1530, %v160
  %v1543 = vsel %vm191, %v1531, %v161
  %v1544 = vsel %vm191, %v1532, %v162
  %v1545 = vld [vmem:[%s5] sm:$0xff]
  %v1546 = vld [vmem:[%s5 + $0x8] sm:$0xff]
  %v1547 = vld [vmem:[%s5 + $0x10] sm:$0xff]
  %v1548 = vld [vmem:[%s5 + $0x18] sm:$0xff]
  %v1549 = vld [vmem:[%s6] sm:$0xff]
  %v1550 = vld [vmem:[%s6 + $0x8] sm:$0xff]
  %v1551 = vld [vmem:[%s6 + $0x10] sm:$0xff]
  %v1552 = vld [vmem:[%s6 + $0x18] sm:$0xff]
  %1554 = vset.pattern.permute.xlu0 0
  %1555 = vperm.xlu0 %1554, %v1549
  %v1556 = vpop.permute.xlu0 %1555
  %1559 = vset.pattern.permute.xlu0 0
  %1560 = vperm.xlu0 %1559, %v1550
  %v1561 = vpop.permute.xlu0 %1560
  %1564 = vset.pattern.permute.xlu0 0
  %1565 = vperm.xlu0 %1564, %v1551
  %v1566 = vpop.permute.xlu0 %1565
  %1569 = vset.pattern.permute.xlu0 0
  %1570 = vperm.xlu0 %1569, %v1552
  %v1571 = vpop.permute.xlu0 %1570
  %vm1573 = vcmask 130048
  %v1575 = vsel %vm1573, %v1545, 0
  %v1578 = vsel %vm1573, %v1546, 0
  %v1581 = vsel %vm1573, %v1547, 0
  %v1584 = vsel %vm1573, %v1548, 0
  %1586 = vmatpush.msra.mxu0 0.0
  %1587 = vmatpush.msra.mxu0 0.0
  %1588 = vmatpush.msra.mxu0 0.0
  %1589 = vmatpush.msra.mxu0 0.0
  %1590 = vmatpush.msra.mxu0 0.0
  %1591 = vmatpush.msra.mxu0 0.0
  %1592 = vmatpush.msra.mxu0 0.0
  %1593 = vmatpush.msra.mxu0 0.0
  %1594 = vmatpush.msra.mxu0 0.0
  %1595 = vmatpush.msra.mxu0 0.0
  %1596 = vmatpush.msra.mxu0 0.0
  %1597 = vmatpush.msra.mxu0 0.0
  %1598 = vmatpush.msra.mxu0 0.0
  %1599 = vmatpush.msra.mxu0 0.0
  %1600 = vmatpush.msra.mxu0 %v1541
  %1601 = vmatpush.msra.mxu0 %v1537
  %1602 = vmatmul.f32.gmra.mxu0 %v1575
  %v1603 = vpop.f32.mrf.mxu0
  %v1604 = vadd.f32 %v1556, %v1603
  %1605 = vmatmul.f32.gmra.mxu0 %v1578
  %v1606 = vpop.f32.mrf.mxu0
  %v1607 = vadd.f32 %v1561, %v1606
  %1608 = vmatmul.f32.gmra.mxu0 %v1581
  %v1609 = vpop.f32.mrf.mxu0
  %v1610 = vadd.f32 %v1566, %v1609
  %1611 = vmatmul.f32.gmra.mxu0 %v1584
  %v1612 = vpop.f32.mrf.mxu0
  %v1613 = vadd.f32 %v1571, %v1612
  %1614 = vdwg.mxu0
  %1615 = vmatpush.msra.mxu0 0.0
  %1616 = vmatpush.msra.mxu0 0.0
  %1617 = vmatpush.msra.mxu0 0.0
  %1618 = vmatpush.msra.mxu0 0.0
  %1619 = vmatpush.msra.mxu0 0.0
  %1620 = vmatpush.msra.mxu0 0.0
  %1621 = vmatpush.msra.mxu0 0.0
  %1622 = vmatpush.msra.mxu0 0.0
  %1623 = vmatpush.msra.mxu0 0.0
  %1624 = vmatpush.msra.mxu0 0.0
  %1625 = vmatpush.msra.mxu0 0.0
  %1626 = vmatpush.msra.mxu0 0.0
  %1627 = vmatpush.msra.mxu0 0.0
  %1628 = vmatpush.msra.mxu0 0.0
  %1629 = vmatpush.msra.mxu0 %v1542
  %1630 = vmatpush.msra.mxu0 %v1538
  %1631 = vmatmul.f32.gmra.mxu0 %v1575
  %v1632 = vpop.f32.mrf.mxu0
  %v1633 = vadd.f32 %v1556, %v1632
  %1634 = vmatmul.f32.gmra.mxu0 %v1578
  %v1635 = vpop.f32.mrf.mxu0
  %v1636 = vadd.f32 %v1561, %v1635
  %1637 = vmatmul.f32.gmra.mxu0 %v1581
  %v1638 = vpop.f32.mrf.mxu0
  %v1639 = vadd.f32 %v1566, %v1638
  %1640 = vmatmul.f32.gmra.mxu0 %v1584
  %v1641 = vpop.f32.mrf.mxu0
  %v1642 = vadd.f32 %v1571, %v1641
  %1643 = vdwg.mxu0
  %1644 = vmatpush.msra.mxu0 0.0
  %1645 = vmatpush.msra.mxu0 0.0
  %1646 = vmatpush.msra.mxu0 0.0
  %1647 = vmatpush.msra.mxu0 0.0
  %1648 = vmatpush.msra.mxu0 0.0
  %1649 = vmatpush.msra.mxu0 0.0
  %1650 = vmatpush.msra.mxu0 0.0
  %1651 = vmatpush.msra.mxu0 0.0
  %1652 = vmatpush.msra.mxu0 0.0
  %1653 = vmatpush.msra.mxu0 0.0
  %1654 = vmatpush.msra.mxu0 0.0
  %1655 = vmatpush.msra.mxu0 0.0
  %1656 = vmatpush.msra.mxu0 0.0
  %1657 = vmatpush.msra.mxu0 0.0
  %1658 = vmatpush.msra.mxu0 %v1543
  %1659 = vmatpush.msra.mxu0 %v1539
  %1660 = vmatmul.f32.gmra.mxu0 %v1575
  %v1661 = vpop.f32.mrf.mxu0
  %v1662 = vadd.f32 %v1556, %v1661
  %1663 = vmatmul.f32.gmra.mxu0 %v1578
  %v1664 = vpop.f32.mrf.mxu0
  %v1665 = vadd.f32 %v1561, %v1664
  %1666 = vmatmul.f32.gmra.mxu0 %v1581
  %v1667 = vpop.f32.mrf.mxu0
  %v1668 = vadd.f32 %v1566, %v1667
  %1669 = vmatmul.f32.gmra.mxu0 %v1584
  %v1670 = vpop.f32.mrf.mxu0
  %v1671 = vadd.f32 %v1571, %v1670
  %1672 = vdwg.mxu0
  %1673 = vmatpush.msra.mxu0 0.0
  %1674 = vmatpush.msra.mxu0 0.0
  %1675 = vmatpush.msra.mxu0 0.0
  %1676 = vmatpush.msra.mxu0 0.0
  %1677 = vmatpush.msra.mxu0 0.0
  %1678 = vmatpush.msra.mxu0 0.0
  %1679 = vmatpush.msra.mxu0 0.0
  %1680 = vmatpush.msra.mxu0 0.0
  %1681 = vmatpush.msra.mxu0 0.0
  %1682 = vmatpush.msra.mxu0 0.0
  %1683 = vmatpush.msra.mxu0 0.0
  %1684 = vmatpush.msra.mxu0 0.0
  %1685 = vmatpush.msra.mxu0 0.0
  %1686 = vmatpush.msra.mxu0 0.0
  %1687 = vmatpush.msra.mxu0 %v1544
  %1688 = vmatpush.msra.mxu0 %v1540
  %1689 = vmatmul.f32.gmra.mxu0 %v1575
  %v1690 = vpop.f32.mrf.mxu0
  %v1691 = vadd.f32 %v1556, %v1690
  %1692 = vmatmul.f32.gmra.mxu0 %v1578
  %v1693 = vpop.f32.mrf.mxu0
  %v1694 = vadd.f32 %v1561, %v1693
  %1695 = vmatmul.f32.gmra.mxu0 %v1581
  %v1696 = vpop.f32.mrf.mxu0
  %v1697 = vadd.f32 %v1566, %v1696
  %1698 = vmatmul.f32.gmra.mxu0 %v1584
  %v1699 = vpop.f32.mrf.mxu0
  %v1700 = vadd.f32 %v1571, %v1699
  %1701 = vdwg.mxu0
  %v1702 = vadd.f32 %v1604, %v28
  %v1703 = vadd.f32 %v1633, %v29
  %v1704 = vadd.f32 %v1662, %v30
  %v1705 = vadd.f32 %v1691, %v31
  %v1706 = vadd.f32 %v1607, %v32
  %v1707 = vadd.f32 %v1636, %v33
  %v1708 = vadd.f32 %v1665, %v34
  %v1709 = vadd.f32 %v1694, %v35
  %v1710 = vadd.f32 %v1610, %v36
  %v1711 = vadd.f32 %v1639, %v37
  %v1712 = vadd.f32 %v1668, %v38
  %v1713 = vadd.f32 %v1697, %v39
  %v1714 = vadd.f32 %v1613, %v40
  %v1715 = vadd.f32 %v1642, %v41
  %v1716 = vadd.f32 %v1671, %v42
  %v1717 = vadd.f32 %v1700, %v43
  %v1718 = vmax.f32 %v1702, 0.0
  %v1719 = vmax.f32 %v1703, 0.0
  %v1720 = vmax.f32 %v1704, 0.0
  %v1721 = vmax.f32 %v1705, 0.0
  %v1722 = vmax.f32 %v1706, 0.0
  %v1723 = vmax.f32 %v1707, 0.0
  %v1724 = vmax.f32 %v1708, 0.0
  %v1725 = vmax.f32 %v1709, 0.0
  %v1726 = vmax.f32 %v1710, 0.0
  %v1727 = vmax.f32 %v1711, 0.0
  %v1728 = vmax.f32 %v1712, 0.0
  %v1729 = vmax.f32 %v1713, 0.0
  %v1730 = vmax.f32 %v1714, 0.0
  %v1731 = vmax.f32 %v1715, 0.0
  %v1732 = vmax.f32 %v1716, 0.0
  %v1733 = vmax.f32 %v1717, 0.0
  %1734 = vst [vmem:[%s7] sm:$0xff] %v1718
  %1735 = vst [vmem:[%s7 + $0x8] sm:$0xff] %v1719
  %1736 = vst [vmem:[%s7 + $0x10] sm:$0xff] %v1720
  %1737 = vst [vmem:[%s7 + $0x18] sm:$0xff] %v1721
  %1738 = vst [vmem:[%s7 + $0x20] sm:$0xff] %v1722
  %1739 = vst [vmem:[%s7 + $0x28] sm:$0xff] %v1723
  %1740 = vst [vmem:[%s7 + $0x30] sm:$0xff] %v1724
  %1741 = vst [vmem:[%s7 + $0x38] sm:$0xff] %v1725
  %1742 = vst [vmem:[%s7 + $0x40] sm:$0xff] %v1726
  %1743 = vst [vmem:[%s7 + $0x48] sm:$0xff] %v1727
  %1744 = vst [vmem:[%s7 + $0x50] sm:$0xff] %v1728
  %1745 = vst [vmem:[%s7 + $0x58] sm:$0xff] %v1729
  %1746 = vst [vmem:[%s7 + $0x60] sm:$0xff] %v1730
  %1747 = vst [vmem:[%s7 + $0x68] sm:$0xff] %v1731
  %1748 = vst [vmem:[%s7 + $0x70] sm:$0xff] %v1732
  %1749 = vst [vmem:[%s7 + $0x78] sm:$0xff] %v1733
  // Predicated region
  $region30: #{bottle2neck_forward.1} parent=0 // pred_check
    _
  $region31: #{bottle2neck_forward.1} parent=0 // pred_check_branch
    %1751 = sbr.rel (0) target = $region33
  $region32: #{bottle2neck_forward.1} parent=0 // pred_region
    _
  $region33: #{bottle2neck_forward.1} parent=0 // pred_fallthru
    _
  // Predicated region
  $region34: #{bottle2neck_forward.1} parent=0 // pred_check
    _
  $region35: #{bottle2neck_forward.1} parent=0 // pred_check_branch
    %1753 = sbr.rel (0) target = $region37
  $region36: #{bottle2neck_forward.1} parent=0 // pred_region
    _
  $region37: #{bottle2neck_forward.1} parent=0 // pred_fallthru
    _

</llo_original>
